<compile_context>
chip_gen: v6e
topology: v6e:2x2x1
jax: 0.10.0
libtpu: 0.0.40
codegen_flags: <defaults>
</compile_context>

<pallas_src>
import jax
import jax.numpy as jnp
import numpy as np
from jax import lax
from jax.experimental import pallas as pl
from jax.experimental.pallas import tpu as pltpu


def _nll_kernel(rows_ref, lhs_ref, y_col_ref, out_ref, acc_ref):
    i = pl.program_id(1)

    @pl.when(i == 0)
    def _():
        acc_ref[...] = jnp.zeros_like(acc_ref)

    y_row = rows_ref[0:1, :]          # (1, TJ)  anchor times (sublane 0 of the row stack)
    y_col = y_col_ref[...]            # (TI, 1)  contributor times
    # mask[a, b] = (y[j0+b] - y[i0+a] <= 0)  == the torch mask
    maskf = ((y_row - y_col) <= 0.0).astype(jnp.float32)          # (TI, TJ)

    # MXU offload: lhs = [exp(risk_shifted); ones] (2, TI); one small matmul replaces
    # the select and both cross-sublane reductions.  f32 operands + HIGHEST precision.
    acc_ref[...] += jnp.dot(lhs_ref[...], maskf,
                            precision=lax.Precision.HIGHEST,
                            preferred_element_type=jnp.float32)   # rows: [num; den]

    @pl.when(i == pl.num_programs(1) - 1)
    def _():
        acc = acc_ref[...]            # (2, TJ): row 0 = num, row 1 = den
        rows = rows_ref[...]          # (3, TJ): [y, risk_shifted, e]
        log_loss = jnp.log(acc[0:1, :] / acc[1:2, :])
        out_ref[...] = (rows[1:2, :] - log_loss) * rows[2:3, :]


def _round_up(x, m):
    return ((x + m - 1) // m) * m


def negative_log_likelihood(risk_pred, y, e, *, tile_i=None, tile_j=None):
    """risk_pred, y, e: float arrays of shape (N, 1) (or (N,)). Returns scalar f32 loss."""
    risk_pred = jnp.asarray(risk_pred, jnp.float32).reshape(-1)
    y = jnp.asarray(y, jnp.float32).reshape(-1)
    e = jnp.asarray(e, jnp.float32).reshape(-1)
    n = y.shape[0]

    # exp hoisted out of the kernel; max-shift cancels exactly in the loss but makes
    # exp() overflow-proof.
    # TODO(synk): if the risk spread exceeds ~87, num can underflow to 0 for some
    # anchors (the torch reference has the mirror-image overflow problem instead).
    risk_s = risk_pred - jnp.max(risk_pred)
    exp_risk = jnp.exp(risk_s)

    # Tile selection: pad N up to the tile size (large tiles amortize grid-step
    # overhead) instead of shrinking tiles for awkward N.
    base = _round_up(n, 256)
    tj = tile_j or min(2048, base)
    ti = tile_i or min(512, tj)
    n_pad = _round_up(n, tj)
    assert n_pad % tj == 0 and n_pad % ti == 0 and tj % 128 == 0 and ti % 8 == 0
    pad = n_pad - n

    # Padded contributors: exp_risk = ones = 0 -> contribute nothing to num/den.
    # Padded anchors: y = -1e30 keeps den > 0 (no 0/0 NaN); e = 0 zeroes their output.
    y_p = jnp.pad(y, (0, pad), constant_values=-1e30)
    risk_p = jnp.pad(risk_s, (0, pad))
    e_p = jnp.pad(e, (0, pad))
    exp_p = jnp.pad(exp_risk, (0, pad))
    ones_p = jnp.pad(jnp.ones((n,), jnp.float32), (0, pad))

    rows = jnp.stack([y_p, risk_p, e_p], axis=0)   # (3, n_pad) per-anchor row data
    lhs = jnp.stack([exp_p, ones_p], axis=0)       # (2, n_pad) lane-dense matmul LHS
    y_col = y_p.reshape(n_pad, 1)                  # (n_pad, 1) mask operand

    grid = (n_pad // tj, n_pad // ti)   # (j blocks [parallel], i blocks [arbitrary])

    contrib = pl.pallas_call(
        _nll_kernel,
        out_shape=jax.ShapeDtypeStruct((1, n_pad), jnp.float32),
        grid_spec=pltpu.PrefetchScalarGridSpec(
            num_scalar_prefetch=0,
            grid=grid,
            in_specs=[
                pl.BlockSpec((3, tj), lambda j, i: (0, j)),   # rows: [y, risk, e]
                pl.BlockSpec((2, ti), lambda j, i: (0, i)),   # lhs:  [exp_risk, ones]
                pl.BlockSpec((ti, 1), lambda j, i: (i, 0)),   # y_col
            ],
            out_specs=pl.BlockSpec((1, tj), lambda j, i: (0, j)),
            scratch_shapes=[
                pltpu.VMEM((2, tj), jnp.float32),   # [num; den] accumulator
            ],
        ),
        compiler_params=pltpu.CompilerParams(
            dimension_semantics=("parallel", "arbitrary"),
            vmem_limit_bytes=48 * 1024 * 1024),
    )(rows, lhs, y_col)

    # O(N) finalization: -sum_j contrib[j] / sum_j e[j]  (NaN if sum(e)==0, as in torch)
    return -jnp.sum(contrib) / jnp.sum(e)


def _reference(risk_pred, y, e):
    # pure-JAX restatement of the torch forward, for a sanity check
    mask = jnp.where((y.T - y) > 0, 0.0, 1.0)
    log_loss = jnp.exp(risk_pred) * mask
    log_loss = jnp.sum(log_loss, axis=0) / jnp.sum(mask, axis=0)
    log_loss = jnp.log(log_loss).reshape(-1, 1)
    return -jnp.sum((risk_pred - log_loss) * e) / jnp.sum(e)


if __name__ == "__main__":
    key = jax.random.PRNGKey(0)

    # small shape consistent with the module: a batch of N subjects, each (N, 1)
    N = 8
    k1, k2, k3 = jax.random.split(key, 3)
    risk_pred = jax.random.normal(k1, (N, 1), dtype=jnp.float32)
    y = jax.random.uniform(k2, (N, 1), dtype=jnp.float32) * 10.0     # survival times
    e = (jax.random.uniform(k3, (N, 1)) > 0.3).astype(jnp.float32)   # event indicators
    e = e.at[0, 0].set(1.0)                                          # ensure sum(e) > 0

    loss = negative_log_likelihood(risk_pred, y, e)
    jax.block_until_ready(loss)
    ref = _reference(risk_pred, y, e)
    assert np.allclose(np.asarray(loss), np.asarray(ref), rtol=1e-5, atol=1e-5), (
        float(loss), float(ref))

    # non-aligned N exercising padding, a multi-block grid (3 j-blocks x 6 i-blocks)
    # and the cross-i accumulate / finalize path
    N2 = 600
    k4, k5, k6 = jax.random.split(jax.random.PRNGKey(1), 3)
    risk2 = jax.random.normal(k4, (N2, 1), dtype=jnp.float32)
    y2 = jax.random.uniform(k5, (N2, 1), dtype=jnp.float32) * 10.0
    e2 = (jax.random.uniform(k6, (N2, 1)) > 0.3).astype(jnp.float32)
    e2 = e2.at[0, 0].set(1.0)

    loss2 = negative_log_likelihood(risk2, y2, e2, tile_i=128, tile_j=256)
    jax.block_until_ready(loss2)
    ref2 = _reference(risk2, y2, e2)
    assert np.allclose(np.asarray(loss2), np.asarray(ref2), rtol=1e-5, atol=1e-5), (
        float(loss2), float(ref2))

    print("KERNEL_OK")
</pallas_src>

<mosaic_0001>
module attributes {stable_mosaic.version = 11 : i64} {
  func.func @_nll_kernel(%arg0: i32, %arg1: i32, %arg2: memref<3x256xf32, #tpu.memory_space<vmem>>, %arg3: memref<2x256xf32, #tpu.memory_space<vmem>>, %arg4: memref<256x1xf32, #tpu.memory_space<vmem>>, %arg5: memref<1x256xf32, #tpu.memory_space<vmem>>, %arg6: memref<2x256xf32, #tpu.memory_space<vmem>>) attributes {dimension_semantics = [#tpu.dimension_semantics<parallel>, #tpu.dimension_semantics<arbitrary>], iteration_bounds = array<i64: 1, 1>, scalar_prefetch = 0 : i64, scratch_operands = 1 : i64, tpu.core_type = #tpu.core_type<tc>, window_params = [{transform_indices = @transform_0, window_bounds = array<i64: 3, 256>}, {transform_indices = @transform_1, window_bounds = array<i64: 2, 256>}, {transform_indices = @transform_2, window_bounds = array<i64: 256, 1>}, {transform_indices = @transform_3, window_bounds = array<i64: 1, 256>}]} {
    %c0_i32 = arith.constant 0 : i32
    %0 = arith.cmpi eq, %arg1, %c0_i32 : i32
    %1 = arith.extui %0 : i1 to i32
    %c0_i32_0 = arith.constant 0 : i32
    %2 = arith.cmpi ne, %1, %c0_i32_0 : i32
    scf.if %2 {
      %cst_13 = arith.constant 0.000000e+00 : f32
      %20 = vector.broadcast %cst_13 : f32 to vector<2x256xf32>
      %c0_14 = arith.constant 0 : index
      %c0_15 = arith.constant 0 : index
      %21 = vector.load %arg6[%c0_14, %c0_15] : memref<2x256xf32, #tpu.memory_space<vmem>>, vector<2x256xf32>
      tpu.vector_store %arg6[%c0_14, %c0_15], %20 {strides = array<i32>} : memref<2x256xf32, #tpu.memory_space<vmem>>, vector<2x256xf32>,
    } else {
    }
    %c0 = arith.constant 0 : index
    %c0_1 = arith.constant 0 : index
    %3 = vector.load %arg2[%c0, %c0_1] : memref<3x256xf32, #tpu.memory_space<vmem>>, vector<1x256xf32>
    %c0_2 = arith.constant 0 : index
    %c0_3 = arith.constant 0 : index
    %4 = vector.load %arg4[%c0_2, %c0_3] : memref<256x1xf32, #tpu.memory_space<vmem>>, vector<256x1xf32>
    %5 = vector.broadcast %3 : vector<1x256xf32> to vector<256x256xf32>
    %6 = vector.broadcast %4 : vector<256x1xf32> to vector<256x256xf32>
    %7 = arith.subf %5, %6 : vector<256x256xf32>
    %cst = arith.constant 0.000000e+00 : f32
    %8 = vector.broadcast %cst : f32 to vector<256x256xf32>
    %9 = arith.cmpf ole, %7, %8 : vector<256x256xf32>
    %10 = arith.extui %9 : vector<256x256xi1> to vector<256x256xi32>
    %11 = arith.sitofp %10 : vector<256x256xi32> to vector<256x256xf32>
    %c0_4 = arith.constant 0 : index
    %c0_5 = arith.constant 0 : index
    %12 = vector.load %arg6[%c0_4, %c0_5] : memref<2x256xf32, #tpu.memory_space<vmem>>, vector<2x256xf32>
    %c0_6 = arith.constant 0 : index
    %c0_7 = arith.constant 0 : index
    %13 = vector.load %arg3[%c0_6, %c0_7] : memref<2x256xf32, #tpu.memory_space<vmem>>, vector<2x256xf32>
    %cst_8 = arith.constant dense<0.000000e+00> : vector<2x256xf32>
    %14 = tpu.matmul %13, %11, %cst_8 {dimension_numbers = #tpu.dot_dimension_numbers<[1], [0], [0], [1], [0, 0, 1, 1], [], []>, precision = #tpu.contract_precision<fp32>} : vector<2x256xf32>, vector<256x256xf32>, vector<2x256xf32> -> vector<2x256xf32>
    %15 = arith.addf %12, %14 : vector<2x256xf32>
    %c0_9 = arith.constant 0 : index
    %c0_10 = arith.constant 0 : index
    %16 = vector.load %arg6[%c0_9, %c0_10] : memref<2x256xf32, #tpu.memory_space<vmem>>, vector<2x256xf32>
    tpu.vector_store %arg6[%c0_9, %c0_10], %15 {strides = array<i32>} : memref<2x256xf32, #tpu.memory_space<vmem>>, vector<2x256xf32>,
    %c0_i32_11 = arith.constant 0 : i32
    %17 = arith.cmpi eq, %arg1, %c0_i32_11 : i32
    %18 = arith.extui %17 : i1 to i32
    %c0_i32_12 = arith.constant 0 : i32
    %19 = arith.cmpi ne, %18, %c0_i32_12 : i32
    scf.if %19 {
      %c0_13 = arith.constant 0 : index
      %c0_14 = arith.constant 0 : index
      %20 = vector.load %arg6[%c0_13, %c0_14] : memref<2x256xf32, #tpu.memory_space<vmem>>, vector<2x256xf32>
      %c0_15 = arith.constant 0 : index
      %c0_16 = arith.constant 0 : index
      %21 = vector.load %arg2[%c0_15, %c0_16] : memref<3x256xf32, #tpu.memory_space<vmem>>, vector<3x256xf32>
      %22 = vector.extract_strided_slice %20 {offsets = [0, 0], sizes = [1, 256], strides = [1, 1]} : vector<2x256xf32> to vector<1x256xf32>
      %23 = vector.extract_strided_slice %20 {offsets = [1, 0], sizes = [1, 256], strides = [1, 1]} : vector<2x256xf32> to vector<1x256xf32>
      %24 = arith.divf %22, %23 : vector<1x256xf32>
      %25 = math.log %24 : vector<1x256xf32>
      %26 = vector.extract_strided_slice %21 {offsets = [1, 0], sizes = [1, 256], strides = [1, 1]} : vector<3x256xf32> to vector<1x256xf32>
      %27 = arith.subf %26, %25 : vector<1x256xf32>
      %28 = vector.extract_strided_slice %21 {offsets = [2, 0], sizes = [1, 256], strides = [1, 1]} : vector<3x256xf32> to vector<1x256xf32>
      %29 = arith.mulf %27, %28 : vector<1x256xf32>
      %c0_17 = arith.constant 0 : index
      %c0_18 = arith.constant 0 : index
      %30 = vector.load %arg5[%c0_17, %c0_18] : memref<1x256xf32, #tpu.memory_space<vmem>>, vector<1x256xf32>
      tpu.vector_store %arg5[%c0_17, %c0_18], %29 {strides = array<i32>} : memref<1x256xf32, #tpu.memory_space<vmem>>, vector<1x256xf32>,
    } else {
    }
    return
  }
  func.func @transform_0(%arg0: i32, %arg1: i32) -> (i32, i32) {
    %c0_i32 = arith.constant 0 : i32
    %c0_i32_0 = arith.constant 0 : i32
    return %c0_i32, %arg0 : i32, i32
  }
  func.func @transform_1(%arg0: i32, %arg1: i32) -> (i32, i32) {
    %c0_i32 = arith.constant 0 : i32
    %c0_i32_0 = arith.constant 0 : i32
    return %c0_i32, %arg1 : i32, i32
  }
  func.func @transform_2(%arg0: i32, %arg1: i32) -> (i32, i32) {
    %c0_i32 = arith.constant 0 : i32
    %c0_i32_0 = arith.constant 0 : i32
    return %arg1, %c0_i32 : i32, i32
  }
  func.func @transform_3(%arg0: i32, %arg1: i32) -> (i32, i32) {
    %c0_i32 = arith.constant 0 : i32
    %c0_i32_0 = arith.constant 0 : i32
    return %c0_i32, %arg0 : i32, i32
  }
}

</mosaic_0001>

<llo_original>
// kernel: tpu_custom_call.1
$region0: #{tpu_custom_call.1}
  #allocation0 [shape = 'u32[]', space=smem, size = 0x4, offset = 0x4, fixed_abs, tag = 'smem constant byte address 0x4 - core index']
  #allocation1 [shape = 'u32[144,128]{1,0:T(1,128)}', space=vmem, size = 0x12000, scoped, tag = 'internal scratch']
  #allocation2 [shape = 'f32[2,256]{1,0:T(2,128)}', space=vmem, size = 0x800, scoped, tag = 'scratch operand']
  %s0 = inlined_call_operand.vmem [shape: f32[3,256], index: 0, kind: input, shape index: {}]
  %s1 = inlined_call_operand.vmem [shape: f32[2,256], index: 1, kind: input, shape index: {}]
  %s2 = inlined_call_operand.vmem [shape: f32[256,1], index: 2, kind: input, shape index: {}]
  %s3 = inlined_call_operand.hbm [shape: f32[1,256], index: 3, kind: output, shape index: {}]
  %s4 = sld [smem:[#allocation0]]
  $region30: #{tpu_custom_call.1} parent=0
    _
  %s6 = ssub.s32 1, %s4
  %s7 = scalar_select 0, %s6, %s4
  $region1: #{tpu_custom_call.1} parent=0
    #allocation3 [shape = 'u8[1024]{0}', space=vmem, size = 0x400, scoped, tag = 'output window, operand 0, single buffered']
    #allocation4 [shape = 's32[1]{0}', space=sflag, size = 0x4, scoped, tag = 'scoped memory for tpu_custom_call.1']
    %8 = vsyncpa [#allocation4], 0
    // Predicated region
    $region2: #{tpu_custom_call.1} parent=1 // pred_check
      _
    $region3: #{tpu_custom_call.1} parent=1 // pred_check_branch
      %10 = sbr.rel (0) target = $region5
    $region4: #{tpu_custom_call.1} parent=1 // pred_region
      _
    $region5: #{tpu_custom_call.1} parent=1 // pred_fallthru
      _
    // Predicated region
    $region6: #{tpu_custom_call.1} parent=1 // pred_check
      _
    $region7: #{tpu_custom_call.1} parent=1 // pred_check_branch
      %12 = sbr.rel (0) target = $region9
    $region8: #{tpu_custom_call.1} parent=1 // pred_region
      _
    $region9: #{tpu_custom_call.1} parent=1 // pred_fallthru
      _
    // Predicated region
    $region10: #{tpu_custom_call.1} parent=1 // pred_check
      _
    $region11: #{tpu_custom_call.1} parent=1 // pred_check_branch
      %14 = sbr.rel (0) target = $region13
    $region12: #{tpu_custom_call.1} parent=1 // pred_region
      _
    $region13: #{tpu_custom_call.1} parent=1 // pred_fallthru
      _
    %p15 = scmp.eq.s32.totalorder 0, 0
    // Predicated region
    $region14: #{tpu_custom_call.1} parent=1 // pred_check
      %p16 = pneg %p15
    $region15: #{tpu_custom_call.1} parent=1 // pred_check_branch
      %18 = sbr.rel (%p16) target = $region17
    $region16: #{tpu_custom_call.1} parent=1 // pred_region
      %19 = vst [vmem:[#allocation2] sm:$0xf] 0.0
    $region17: #{tpu_custom_call.1} parent=1 // pred_fallthru
      _
    %v20 = vld [vmem:[%s0] ss:$4 sm:$0x3]
    %v21 = vld [vmem:[%s2] sm:$0xff]
    %v22 = vld [vmem:[%s2 + $0x8] sm:$0xff]
    %v23 = vld [vmem:[%s2 + $0x10] sm:$0xff]
    %v24 = vld [vmem:[%s2 + $0x18] sm:$0xff]
    %v25 = vld [vmem:[%s2 + $0x20] sm:$0xff]
    %v26 = vld [vmem:[%s2 + $0x28] sm:$0xff]
    %v27 = vld [vmem:[%s2 + $0x30] sm:$0xff]
    %v28 = vld [vmem:[%s2 + $0x38] sm:$0xff]
    %v29 = vld [vmem:[%s2 + $0x40] sm:$0xff]
    %v30 = vld [vmem:[%s2 + $0x48] sm:$0xff]
    %v31 = vld [vmem:[%s2 + $0x50] sm:$0xff]
    %v32 = vld [vmem:[%s2 + $0x58] sm:$0xff]
    %v33 = vld [vmem:[%s2 + $0x60] sm:$0xff]
    %v34 = vld [vmem:[%s2 + $0x68] sm:$0xff]
    %v35 = vld [vmem:[%s2 + $0x70] sm:$0xff]
    %v36 = vld [vmem:[%s2 + $0x78] sm:$0xff]
    %v37 = vld [vmem:[%s2 + $0x80] sm:$0xff]
    %v38 = vld [vmem:[%s2 + $0x88] sm:$0xff]
    %v39 = vld [vmem:[%s2 + $0x90] sm:$0xff]
    %v40 = vld [vmem:[%s2 + $0x98] sm:$0xff]
    %v41 = vld [vmem:[%s2 + $0xa0] sm:$0xff]
    %v42 = vld [vmem:[%s2 + $0xa8] sm:$0xff]
    %v43 = vld [vmem:[%s2 + $0xb0] sm:$0xff]
    %v44 = vld [vmem:[%s2 + $0xb8] sm:$0xff]
    %v45 = vld [vmem:[%s2 + $0xc0] sm:$0xff]
    %v46 = vld [vmem:[%s2 + $0xc8] sm:$0xff]
    %v47 = vld [vmem:[%s2 + $0xd0] sm:$0xff]
    %v48 = vld [vmem:[%s2 + $0xd8] sm:$0xff]
    %v49 = vld [vmem:[%s2 + $0xe0] sm:$0xff]
    %v50 = vld [vmem:[%s2 + $0xe8] sm:$0xff]
    %v51 = vld [vmem:[%s2 + $0xf0] sm:$0xff]
    %v52 = vld [vmem:[%s2 + $0xf8] sm:$0xff]
    %v54 = vlaneseq
    %v55 = vshrl.u32 %v54, 7
    %v56 = vsub.s32 0, %v55
    %v57 = vrot.slane %v20, %v56
    %v58 = vlaneseq
    %v59 = vshrl.u32 %v58, 7
    %v60 = vsub.s32 1, %v59
    %v61 = vrot.slane %v20, %v60
    %65 = vset.pattern.permute.xlu0 0
    %66 = vperm.xlu0 %65, %v21
    %v67 = vpop.permute.xlu0 %66
    %70 = vset.pattern.permute.xlu0 0
    %71 = vperm.xlu0 %70, %v22
    %v72 = vpop.permute.xlu0 %71
    %75 = vset.pattern.permute.xlu0 0
    %76 = vperm.xlu0 %75, %v23
    %v77 = vpop.permute.xlu0 %76
    %80 = vset.pattern.permute.xlu0 0
    %81 = vperm.xlu0 %80, %v24
    %v82 = vpop.permute.xlu0 %81
    %85 = vset.pattern.permute.xlu0 0
    %86 = vperm.xlu0 %85, %v25
    %v87 = vpop.permute.xlu0 %86
    %90 = vset.pattern.permute.xlu0 0
    %91 = vperm.xlu0 %90, %v26
    %v92 = vpop.permute.xlu0 %91
    %95 = vset.pattern.permute.xlu0 0
    %96 = vperm.xlu0 %95, %v27
    %v97 = vpop.permute.xlu0 %96
    %100 = vset.pattern.permute.xlu0 0
    %101 = vperm.xlu0 %100, %v28
    %v102 = vpop.permute.xlu0 %101
    %105 = vset.pattern.permute.xlu0 0
    %106 = vperm.xlu0 %105, %v29
    %v107 = vpop.permute.xlu0 %106
    %110 = vset.pattern.permute.xlu0 0
    %111 = vperm.xlu0 %110, %v30
    %v112 = vpop.permute.xlu0 %111
    %115 = vset.pattern.permute.xlu0 0
    %116 = vperm.xlu0 %115, %v31
    %v117 = vpop.permute.xlu0 %116
    %120 = vset.pattern.permute.xlu0 0
    %121 = vperm.xlu0 %120, %v32
    %v122 = vpop.permute.xlu0 %121
    %125 = vset.pattern.permute.xlu0 0
    %126 = vperm.xlu0 %125, %v33
    %v127 = vpop.permute.xlu0 %126
    %130 = vset.pattern.permute.xlu0 0
    %131 = vperm.xlu0 %130, %v34
    %v132 = vpop.permute.xlu0 %131
    %135 = vset.pattern.permute.xlu0 0
    %136 = vperm.xlu0 %135, %v35
    %v137 = vpop.permute.xlu0 %136
    %140 = vset.pattern.permute.xlu0 0
    %141 = vperm.xlu0 %140, %v36
    %v142 = vpop.permute.xlu0 %141
    %145 = vset.pattern.permute.xlu0 0
    %146 = vperm.xlu0 %145, %v37
    %v147 = vpop.permute.xlu0 %146
    %150 = vset.pattern.permute.xlu0 0
    %151 = vperm.xlu0 %150, %v38
    %v152 = vpop.permute.xlu0 %151
    %155 = vset.pattern.permute.xlu0 0
    %156 = vperm.xlu0 %155, %v39
    %v157 = vpop.permute.xlu0 %156
    %160 = vset.pattern.permute.xlu0 0
    %161 = vperm.xlu0 %160, %v40
    %v162 = vpop.permute.xlu0 %161
    %165 = vset.pattern.permute.xlu0 0
    %166 = vperm.xlu0 %165, %v41
    %v167 = vpop.permute.xlu0 %166
    %170 = vset.pattern.permute.xlu0 0
    %171 = vperm.xlu0 %170, %v42
    %v172 = vpop.permute.xlu0 %171
    %175 = vset.pattern.permute.xlu0 0
    %176 = vperm.xlu0 %175, %v43
    %v177 = vpop.permute.xlu0 %176
    %180 = vset.pattern.permute.xlu0 0
    %181 = vperm.xlu0 %180, %v44
    %v182 = vpop.permute.xlu0 %181
    %185 = vset.pattern.permute.xlu0 0
    %186 = vperm.xlu0 %185, %v45
    %v187 = vpop.permute.xlu0 %186
    %190 = vset.pattern.permute.xlu0 0
    %191 = vperm.xlu0 %190, %v46
    %v192 = vpop.permute.xlu0 %191
    %195 = vset.pattern.permute.xlu0 0
    %196 = vperm.xlu0 %195, %v47
    %v197 = vpop.permute.xlu0 %196
    %200 = vset.pattern.permute.xlu0 0
    %201 = vperm.xlu0 %200, %v48
    %v202 = vpop.permute.xlu0 %201
    %205 = vset.pattern.permute.xlu0 0
    %206 = vperm.xlu0 %205, %v49
    %v207 = vpop.permute.xlu0 %206
    %210 = vset.pattern.permute.xlu0 0
    %211 = vperm.xlu0 %210, %v50
    %v212 = vpop.permute.xlu0 %211
    %215 = vset.pattern.permute.xlu0 0
    %216 = vperm.xlu0 %215, %v51
    %v217 = vpop.permute.xlu0 %216
    %220 = vset.pattern.permute.xlu0 0
    %221 = vperm.xlu0 %220, %v52
    %v222 = vpop.permute.xlu0 %221
    %v224 = vsub.f32 %v57, %v67
    %v225 = vsub.f32 %v61, %v67
    %v226 = vsub.f32 %v57, %v72
    %v227 = vsub.f32 %v61, %v72
    %v228 = vsub.f32 %v57, %v77
    %v229 = vsub.f32 %v61, %v77
    %v230 = vsub.f32 %v57, %v82
    %v231 = vsub.f32 %v61, %v82
    %v232 = vsub.f32 %v57, %v87
    %v233 = vsub.f32 %v61, %v87
    %v234 = vsub.f32 %v57, %v92
    %v235 = vsub.f32 %v61, %v92
    %v236 = vsub.f32 %v57, %v97
    %v237 = vsub.f32 %v61, %v97
    %v238 = vsub.f32 %v57, %v102
    %v239 = vsub.f32 %v61, %v102
    %v240 = vsub.f32 %v57, %v107
    %v241 = vsub.f32 %v61, %v107
    %v242 = vsub.f32 %v57, %v112
    %v243 = vsub.f32 %v61, %v112
    %v244 = vsub.f32 %v57, %v117
    %v245 = vsub.f32 %v61, %v117
    %v246 = vsub.f32 %v57, %v122
    %v247 = vsub.f32 %v61, %v122
    %v248 = vsub.f32 %v57, %v127
    %v249 = vsub.f32 %v61, %v127
    %v250 = vsub.f32 %v57, %v132
    %v251 = vsub.f32 %v61, %v132
    %v252 = vsub.f32 %v57, %v137
    %v253 = vsub.f32 %v61, %v137
    %v254 = vsub.f32 %v57, %v142
    %v255 = vsub.f32 %v61, %v142
    %v256 = vsub.f32 %v57, %v147
    %v257 = vsub.f32 %v61, %v147
    %v258 = vsub.f32 %v57, %v152
    %v259 = vsub.f32 %v61, %v152
    %v260 = vsub.f32 %v57, %v157
    %v261 = vsub.f32 %v61, %v157
    %v262 = vsub.f32 %v57, %v162
    %v263 = vsub.f32 %v61, %v162
    %v264 = vsub.f32 %v57, %v167
    %v265 = vsub.f32 %v61, %v167
    %v266 = vsub.f32 %v57, %v172
    %v267 = vsub.f32 %v61, %v172
    %v268 = vsub.f32 %v57, %v177
    %v269 = vsub.f32 %v61, %v177
    %v270 = vsub.f32 %v57, %v182
    %v271 = vsub.f32 %v61, %v182
    %v272 = vsub.f32 %v57, %v187
    %v273 = vsub.f32 %v61, %v187
    %v274 = vsub.f32 %v57, %v192
    %v275 = vsub.f32 %v61, %v192
    %v276 = vsub.f32 %v57, %v197
    %v277 = vsub.f32 %v61, %v197
    %v278 = vsub.f32 %v57, %v202
    %v279 = vsub.f32 %v61, %v202
    %v280 = vsub.f32 %v57, %v207
    %v281 = vsub.f32 %v61, %v207
    %v282 = vsub.f32 %v57, %v212
    %v283 = vsub.f32 %v61, %v212
    %v284 = vsub.f32 %v57, %v217
    %v285 = vsub.f32 %v61, %v217
    %v286 = vsub.f32 %v57, %v222
    %v287 = vsub.f32 %v61, %v222
    %vm288 = vcmp.le.f32.partialorder %v224, 0.0
    %vm289 = vcmp.le.f32.partialorder %v225, 0.0
    %vm290 = vcmp.le.f32.partialorder %v226, 0.0
    %vm291 = vcmp.le.f32.partialorder %v227, 0.0
    %vm292 = vcmp.le.f32.partialorder %v228, 0.0
    %vm293 = vcmp.le.f32.partialorder %v229, 0.0
    %vm294 = vcmp.le.f32.partialorder %v230, 0.0
    %vm295 = vcmp.le.f32.partialorder %v231, 0.0
    %vm296 = vcmp.le.f32.partialorder %v232, 0.0
    %vm297 = vcmp.le.f32.partialorder %v233, 0.0
    %vm298 = vcmp.le.f32.partialorder %v234, 0.0
    %vm299 = vcmp.le.f32.partialorder %v235, 0.0
    %vm300 = vcmp.le.f32.partialorder %v236, 0.0
    %vm301 = vcmp.le.f32.partialorder %v237, 0.0
    %vm302 = vcmp.le.f32.partialorder %v238, 0.0
    %vm303 = vcmp.le.f32.partialorder %v239, 0.0
    %vm304 = vcmp.le.f32.partialorder %v240, 0.0
    %vm305 = vcmp.le.f32.partialorder %v241, 0.0
    %vm306 = vcmp.le.f32.partialorder %v242, 0.0
    %vm307 = vcmp.le.f32.partialorder %v243, 0.0
    %vm308 = vcmp.le.f32.partialorder %v244, 0.0
    %vm309 = vcmp.le.f32.partialorder %v245, 0.0
    %vm310 = vcmp.le.f32.partialorder %v246, 0.0
    %vm311 = vcmp.le.f32.partialorder %v247, 0.0
    %vm312 = vcmp.le.f32.partialorder %v248, 0.0
    %vm313 = vcmp.le.f32.partialorder %v249, 0.0
    %vm314 = vcmp.le.f32.partialorder %v250, 0.0
    %vm315 = vcmp.le.f32.partialorder %v251, 0.0
    %vm316 = vcmp.le.f32.partialorder %v252, 0.0
    %vm317 = vcmp.le.f32.partialorder %v253, 0.0
    %vm318 = vcmp.le.f32.partialorder %v254, 0.0
    %vm319 = vcmp.le.f32.partialorder %v255, 0.0
    %vm320 = vcmp.le.f32.partialorder %v256, 0.0
    %vm321 = vcmp.le.f32.partialorder %v257, 0.0
    %vm322 = vcmp.le.f32.partialorder %v258, 0.0
    %vm323 = vcmp.le.f32.partialorder %v259, 0.0
    %vm324 = vcmp.le.f32.partialorder %v260, 0.0
    %vm325 = vcmp.le.f32.partialorder %v261, 0.0
    %vm326 = vcmp.le.f32.partialorder %v262, 0.0
    %vm327 = vcmp.le.f32.partialorder %v263, 0.0
    %vm328 = vcmp.le.f32.partialorder %v264, 0.0
    %vm329 = vcmp.le.f32.partialorder %v265, 0.0
    %vm330 = vcmp.le.f32.partialorder %v266, 0.0
    %vm331 = vcmp.le.f32.partialorder %v267, 0.0
    %vm332 = vcmp.le.f32.partialorder %v268, 0.0
    %vm333 = vcmp.le.f32.partialorder %v269, 0.0
    %vm334 = vcmp.le.f32.partialorder %v270, 0.0
    %vm335 = vcmp.le.f32.partialorder %v271, 0.0
    %vm336 = vcmp.le.f32.partialorder %v272, 0.0
    %vm337 = vcmp.le.f32.partialorder %v273, 0.0
    %vm338 = vcmp.le.f32.partialorder %v274, 0.0
    %vm339 = vcmp.le.f32.partialorder %v275, 0.0
    %vm340 = vcmp.le.f32.partialorder %v276, 0.0
    %vm341 = vcmp.le.f32.partialorder %v277, 0.0
    %vm342 = vcmp.le.f32.partialorder %v278, 0.0
    %vm343 = vcmp.le.f32.partialorder %v279, 0.0
    %vm344 = vcmp.le.f32.partialorder %v280, 0.0
    %vm345 = vcmp.le.f32.partialorder %v281, 0.0
    %vm346 = vcmp.le.f32.partialorder %v282, 0.0
    %vm347 = vcmp.le.f32.partialorder %v283, 0.0
    %vm348 = vcmp.le.f32.partialorder %v284, 0.0
    %vm349 = vcmp.le.f32.partialorder %v285, 0.0
    %vm350 = vcmp.le.f32.partialorder %v286, 0.0
    %vm351 = vcmp.le.f32.partialorder %v287, 0.0
    %v352 = vsel %vm288, 1, 0
    %v353 = vsel %vm289, 1, 0
    %v354 = vsel %vm290, 1, 0
    %v355 = vsel %vm291, 1, 0
    %v356 = vsel %vm292, 1, 0
    %v357 = vsel %vm293, 1, 0
    %v358 = vsel %vm294, 1, 0
    %v359 = vsel %vm295, 1, 0
    %v360 = vsel %vm296, 1, 0
    %v361 = vsel %vm297, 1, 0
    %v362 = vsel %vm298, 1, 0
    %v363 = vsel %vm299, 1, 0
    %v364 = vsel %vm300, 1, 0
    %v365 = vsel %vm301, 1, 0
    %v366 = vsel %vm302, 1, 0
    %v367 = vsel %vm303, 1, 0
    %v368 = vsel %vm304, 1, 0
    %v369 = vsel %vm305, 1, 0
    %v370 = vsel %vm306, 1, 0
    %v371 = vsel %vm307, 1, 0
    %v372 = vsel %vm308, 1, 0
    %v373 = vsel %vm309, 1, 0
    %v374 = vsel %vm310, 1, 0
    %v375 = vsel %vm311, 1, 0
    %v376 = vsel %vm312, 1, 0
    %v377 = vsel %vm313, 1, 0
    %v378 = vsel %vm314, 1, 0
    %v379 = vsel %vm315, 1, 0
    %v380 = vsel %vm316, 1, 0
    %v381 = vsel %vm317, 1, 0
    %v382 = vsel %vm318, 1, 0
    %v383 = vsel %vm319, 1, 0
    %v384 = vsel %vm320, 1, 0
    %v385 = vsel %vm321, 1, 0
    %v386 = vsel %vm322, 1, 0
    %v387 = vsel %vm323, 1, 0
    %v388 = vsel %vm324, 1, 0
    %v389 = vsel %vm325, 1, 0
    %v390 = vsel %vm326, 1, 0
    %v391 = vsel %vm327, 1, 0
    %v392 = vsel %vm328, 1, 0
    %v393 = vsel %vm329, 1, 0
    %v394 = vsel %vm330, 1, 0
    %v395 = vsel %vm331, 1, 0
    %v396 = vsel %vm332, 1, 0
    %v397 = vsel %vm333, 1, 0
    %v398 = vsel %vm334, 1, 0
    %v399 = vsel %vm335, 1, 0
    %v400 = vsel %vm336, 1, 0
    %v401 = vsel %vm337, 1, 0
    %v402 = vsel %vm338, 1, 0
    %v403 = vsel %vm339, 1, 0
    %v404 = vsel %vm340, 1, 0
    %v405 = vsel %vm341, 1, 0
    %v406 = vsel %vm342, 1, 0
    %v407 = vsel %vm343, 1, 0
    %v408 = vsel %vm344, 1, 0
    %v409 = vsel %vm345, 1, 0
    %v410 = vsel %vm346, 1, 0
    %v411 = vsel %vm347, 1, 0
    %v412 = vsel %vm348, 1, 0
    %v413 = vsel %vm349, 1, 0
    %v414 = vsel %vm350, 1, 0
    %v415 = vsel %vm351, 1, 0
    %v416 = vcvt.s32.f32 %v352
    %v417 = vcvt.s32.f32 %v353
    %v418 = vcvt.s32.f32 %v354
    %v419 = vcvt.s32.f32 %v355
    %v420 = vcvt.s32.f32 %v356
    %v421 = vcvt.s32.f32 %v357
    %v422 = vcvt.s32.f32 %v358
    %v423 = vcvt.s32.f32 %v359
    %v424 = vcvt.s32.f32 %v360
    %v425 = vcvt.s32.f32 %v361
    %v426 = vcvt.s32.f32 %v362
    %v427 = vcvt.s32.f32 %v363
    %v428 = vcvt.s32.f32 %v364
    %v429 = vcvt.s32.f32 %v365
    %v430 = vcvt.s32.f32 %v366
    %v431 = vcvt.s32.f32 %v367
    %v432 = vcvt.s32.f32 %v368
    %v433 = vcvt.s32.f32 %v369
    %v434 = vcvt.s32.f32 %v370
    %v435 = vcvt.s32.f32 %v371
    %v436 = vcvt.s32.f32 %v372
    %v437 = vcvt.s32.f32 %v373
    %v438 = vcvt.s32.f32 %v374
    %v439 = vcvt.s32.f32 %v375
    %v440 = vcvt.s32.f32 %v376
    %v441 = vcvt.s32.f32 %v377
    %v442 = vcvt.s32.f32 %v378
    %v443 = vcvt.s32.f32 %v379
    %v444 = vcvt.s32.f32 %v380
    %v445 = vcvt.s32.f32 %v381
    %v446 = vcvt.s32.f32 %v382
    %v447 = vcvt.s32.f32 %v383
    %v448 = vcvt.s32.f32 %v384
    %v449 = vcvt.s32.f32 %v385
    %v450 = vcvt.s32.f32 %v386
    %v451 = vcvt.s32.f32 %v387
    %v452 = vcvt.s32.f32 %v388
    %v453 = vcvt.s32.f32 %v389
    %v454 = vcvt.s32.f32 %v390
    %v455 = vcvt.s32.f32 %v391
    %v456 = vcvt.s32.f32 %v392
    %v457 = vcvt.s32.f32 %v393
    %v458 = vcvt.s32.f32 %v394
    %v459 = vcvt.s32.f32 %v395
    %v460 = vcvt.s32.f32 %v396
    %v461 = vcvt.s32.f32 %v397
    %v462 = vcvt.s32.f32 %v398
    %v463 = vcvt.s32.f32 %v399
    %v464 = vcvt.s32.f32 %v400
    %v465 = vcvt.s32.f32 %v401
    %v466 = vcvt.s32.f32 %v402
    %v467 = vcvt.s32.f32 %v403
    %v468 = vcvt.s32.f32 %v404
    %v469 = vcvt.s32.f32 %v405
    %v470 = vcvt.s32.f32 %v406
    %v471 = vcvt.s32.f32 %v407
    %v472 = vcvt.s32.f32 %v408
    %v473 = vcvt.s32.f32 %v409
    %v474 = vcvt.s32.f32 %v410
    %v475 = vcvt.s32.f32 %v411
    %v476 = vcvt.s32.f32 %v412
    %v477 = vcvt.s32.f32 %v413
    %v478 = vcvt.s32.f32 %v414
    %v479 = vcvt.s32.f32 %v415
    %v480 = vld [vmem:[#allocation2] sm:$0xf]
    %v481 = vld [vmem:[%s1] sm:$0xf]
    %v484 = vunpack.c.l.s4 1983009808
    %v485 = vunpack.c.0.s8 %v484
    %v486 = vlaneseq
    %v487 = vshrl.u32 %v486, 7
    %v488 = vsub.s32 %v485, %v487
    %v489 = vrot.slane %v481, %v488
    %v490 = vcombine.high %v489, %v489
    %v493 = vand.u32 %v447, 4294901760
    %494 = vmatprep.subr.mxu0 %v493
    %v495 = vand.u32 %v446, 4294901760
    %496 = vmatpush1.msra.mxu0 %v495
    %v497 = vand.u32 %v445, 4294901760
    %498 = vmatprep.subr.mxu0 %v497
    %v499 = vand.u32 %v444, 4294901760
    %500 = vmatpush1.msra.mxu0 %v499
    %v501 = vand.u32 %v443, 4294901760
    %502 = vmatprep.subr.mxu0 %v501
    %v503 = vand.u32 %v442, 4294901760
    %504 = vmatpush1.msra.mxu0 %v503
    %v505 = vand.u32 %v441, 4294901760
    %506 = vmatprep.subr.mxu0 %v505
    %v507 = vand.u32 %v440, 4294901760
    %508 = vmatpush1.msra.mxu0 %v507
    %v509 = vand.u32 %v439, 4294901760
    %510 = vmatprep.subr.mxu0 %v509
    %v511 = vand.u32 %v438, 4294901760
    %512 = vmatpush1.msra.mxu0 %v511
    %v513 = vand.u32 %v437, 4294901760
    %514 = vmatprep.subr.mxu0 %v513
    %v515 = vand.u32 %v436, 4294901760
    %516 = vmatpush1.msra.mxu0 %v515
    %v517 = vand.u32 %v435, 4294901760
    %518 = vmatprep.subr.mxu0 %v517
    %v519 = vand.u32 %v434, 4294901760
    %520 = vmatpush1.msra.mxu0 %v519
    %v521 = vand.u32 %v433, 4294901760
    %522 = vmatprep.subr.mxu0 %v521
    %v523 = vand.u32 %v432, 4294901760
    %524 = vmatpush1.msra.mxu0 %v523
    %v525 = vand.u32 %v431, 4294901760
    %526 = vmatprep.subr.mxu0 %v525
    %v527 = vand.u32 %v430, 4294901760
    %528 = vmatpush1.msra.mxu0 %v527
    %v529 = vand.u32 %v429, 4294901760
    %530 = vmatprep.subr.mxu0 %v529
    %v531 = vand.u32 %v428, 4294901760
    %532 = vmatpush1.msra.mxu0 %v531
    %v533 = vand.u32 %v427, 4294901760
    %534 = vmatprep.subr.mxu0 %v533
    %v535 = vand.u32 %v426, 4294901760
    %536 = vmatpush1.msra.mxu0 %v535
    %v537 = vand.u32 %v425, 4294901760
    %538 = vmatprep.subr.mxu0 %v537
    %v539 = vand.u32 %v424, 4294901760
    %540 = vmatpush1.msra.mxu0 %v539
    %v541 = vand.u32 %v423, 4294901760
    %542 = vmatprep.subr.mxu0 %v541
    %v543 = vand.u32 %v422, 4294901760
    %544 = vmatpush1.msra.mxu0 %v543
    %v545 = vand.u32 %v421, 4294901760
    %546 = vmatprep.subr.mxu0 %v545
    %v547 = vand.u32 %v420, 4294901760
    %548 = vmatpush1.msra.mxu0 %v547
    %v549 = vand.u32 %v419, 4294901760
    %550 = vmatprep.subr.mxu0 %v549
    %v551 = vand.u32 %v418, 4294901760
    %552 = vmatpush1.msra.mxu0 %v551
    %v553 = vand.u32 %v417, 4294901760
    %554 = vmatprep.subr.mxu0 %v553
    %v555 = vand.u32 %v416, 4294901760
    %556 = vmatpush1.msra.mxu0 %v555
    %v557 = vand.u32 %v479, 4294901760
    %558 = vmatprep.subr.mxu0 %v557
    %v559 = vand.u32 %v478, 4294901760
    %560 = vmatpush2.msra.mxu0 %v559
    %v561 = vand.u32 %v477, 4294901760
    %562 = vmatprep.subr.mxu0 %v561
    %v563 = vand.u32 %v476, 4294901760
    %564 = vmatpush2.msra.mxu0 %v563
    %v565 = vand.u32 %v475, 4294901760
    %566 = vmatprep.subr.mxu0 %v565
    %v567 = vand.u32 %v474, 4294901760
    %568 = vmatpush2.msra.mxu0 %v567
    %v569 = vand.u32 %v473, 4294901760
    %570 = vmatprep.subr.mxu0 %v569
    %v571 = vand.u32 %v472, 4294901760
    %572 = vmatpush2.msra.mxu0 %v571
    %v573 = vand.u32 %v471, 4294901760
    %574 = vmatprep.subr.mxu0 %v573
    %v575 = vand.u32 %v470, 4294901760
    %576 = vmatpush2.msra.mxu0 %v575
    %v577 = vand.u32 %v469, 4294901760
    %578 = vmatprep.subr.mxu0 %v577
    %v579 = vand.u32 %v468, 4294901760
    %580 = vmatpush2.msra.mxu0 %v579
    %v581 = vand.u32 %v467, 4294901760
    %582 = vmatprep.subr.mxu0 %v581
    %v583 = vand.u32 %v466, 4294901760
    %584 = vmatpush2.msra.mxu0 %v583
    %v585 = vand.u32 %v465, 4294901760
    %586 = vmatprep.subr.mxu0 %v585
    %v587 = vand.u32 %v464, 4294901760
    %588 = vmatpush2.msra.mxu0 %v587
    %v589 = vand.u32 %v463, 4294901760
    %590 = vmatprep.subr.mxu0 %v589
    %v591 = vand.u32 %v462, 4294901760
    %592 = vmatpush2.msra.mxu0 %v591
    %v593 = vand.u32 %v461, 4294901760
    %594 = vmatprep.subr.mxu0 %v593
    %v595 = vand.u32 %v460, 4294901760
    %596 = vmatpush2.msra.mxu0 %v595
    %v597 = vand.u32 %v459, 4294901760
    %598 = vmatprep.subr.mxu0 %v597
    %v599 = vand.u32 %v458, 4294901760
    %600 = vmatpush2.msra.mxu0 %v599
    %v601 = vand.u32 %v457, 4294901760
    %602 = vmatprep.subr.mxu0 %v601
    %v603 = vand.u32 %v456, 4294901760
    %604 = vmatpush2.msra.mxu0 %v603
    %v605 = vand.u32 %v455, 4294901760
    %606 = vmatprep.subr.mxu0 %v605
    %v607 = vand.u32 %v454, 4294901760
    %608 = vmatpush2.msra.mxu0 %v607
    %v609 = vand.u32 %v453, 4294901760
    %610 = vmatprep.subr.mxu0 %v609
    %v611 = vand.u32 %v452, 4294901760
    %612 = vmatpush2.msra.mxu0 %v611
    %v613 = vand.u32 %v451, 4294901760
    %614 = vmatprep.subr.mxu0 %v613
    %v615 = vand.u32 %v450, 4294901760
    %616 = vmatpush2.msra.mxu0 %v615
    %v617 = vand.u32 %v449, 4294901760
    %618 = vmatprep.subr.mxu0 %v617
    %v619 = vand.u32 %v448, 4294901760
    %620 = vmatpush2.msra.mxu0 %v619
    %v621 = vand.u32 %v490, 4294901760
    %v622 = vsub.f32 %v490, %v621
    %v623 = vand.u32 %v622, 4294901760
    %v624 = vsub.f32 %v622, %v623
    %v625 = vand.u32 %v624, 4294901760
    %626 = vmatprep.mubr.f32.mxu0 %v625
    %v627 = vand.u32 %v489, 4294901760
    %v628 = vsub.f32 %v489, %v627
    %v629 = vand.u32 %v628, 4294901760
    %v630 = vsub.f32 %v628, %v629
    %v631 = vand.u32 %v630, 4294901760
    %632 = vmatmul.mubr.f32.gmra.mxu0 %v631
    %v633 = vpop.f32.mrf.mxu0
    %v634 = vadd.f32 0.0, %v633
    %v635 = vpop.f32.mrf.mxu0
    %v636 = vadd.f32 0.0, %v635
    %637 = vdwg.mxu0
    %v638 = vand.u32 %v447, 4294901760
    %v639 = vsub.f32 %v447, %v638
    %v640 = vand.u32 %v639, 4294901760
    %v641 = vsub.f32 %v639, %v640
    %v642 = vand.u32 %v641, 4294901760
    %643 = vmatprep.subr.mxu0 %v642
    %v644 = vand.u32 %v446, 4294901760
    %v645 = vsub.f32 %v446, %v644
    %v646 = vand.u32 %v645, 4294901760
    %v647 = vsub.f32 %v645, %v646
    %v648 = vand.u32 %v647, 4294901760
    %649 = vmatpush1.msra.mxu0 %v648
    %v650 = vand.u32 %v445, 4294901760
    %v651 = vsub.f32 %v445, %v650
    %v652 = vand.u32 %v651, 4294901760
    %v653 = vsub.f32 %v651, %v652
    %v654 = vand.u32 %v653, 4294901760
    %655 = vmatprep.subr.mxu0 %v654
    %v656 = vand.u32 %v444, 4294901760
    %v657 = vsub.f32 %v444, %v656
    %v658 = vand.u32 %v657, 4294901760
    %v659 = vsub.f32 %v657, %v658
    %v660 = vand.u32 %v659, 4294901760
    %661 = vmatpush1.msra.mxu0 %v660
    %v662 = vand.u32 %v443, 4294901760
    %v663 = vsub.f32 %v443, %v662
    %v664 = vand.u32 %v663, 4294901760
    %v665 = vsub.f32 %v663, %v664
    %v666 = vand.u32 %v665, 4294901760
    %667 = vmatprep.subr.mxu0 %v666
    %v668 = vand.u32 %v442, 4294901760
    %v669 = vsub.f32 %v442, %v668
    %v670 = vand.u32 %v669, 4294901760
    %v671 = vsub.f32 %v669, %v670
    %v672 = vand.u32 %v671, 4294901760
    %673 = vmatpush1.msra.mxu0 %v672
    %v674 = vand.u32 %v441, 4294901760
    %v675 = vsub.f32 %v441, %v674
    %v676 = vand.u32 %v675, 4294901760
    %v677 = vsub.f32 %v675, %v676
    %v678 = vand.u32 %v677, 4294901760
    %679 = vmatprep.subr.mxu0 %v678
    %v680 = vand.u32 %v440, 4294901760
    %v681 = vsub.f32 %v440, %v680
    %v682 = vand.u32 %v681, 4294901760
    %v683 = vsub.f32 %v681, %v682
    %v684 = vand.u32 %v683, 4294901760
    %685 = vmatpush1.msra.mxu0 %v684
    %v686 = vand.u32 %v439, 4294901760
    %v687 = vsub.f32 %v439, %v686
    %v688 = vand.u32 %v687, 4294901760
    %v689 = vsub.f32 %v687, %v688
    %v690 = vand.u32 %v689, 4294901760
    %691 = vmatprep.subr.mxu0 %v690
    %v692 = vand.u32 %v438, 4294901760
    %v693 = vsub.f32 %v438, %v692
    %v694 = vand.u32 %v693, 4294901760
    %v695 = vsub.f32 %v693, %v694
    %v696 = vand.u32 %v695, 4294901760
    %697 = vmatpush1.msra.mxu0 %v696
    %v698 = vand.u32 %v437, 4294901760
    %v699 = vsub.f32 %v437, %v698
    %v700 = vand.u32 %v699, 4294901760
    %v701 = vsub.f32 %v699, %v700
    %v702 = vand.u32 %v701, 4294901760
    %703 = vmatprep.subr.mxu0 %v702
    %v704 = vand.u32 %v436, 4294901760
    %v705 = vsub.f32 %v436, %v704
    %v706 = vand.u32 %v705, 4294901760
    %v707 = vsub.f32 %v705, %v706
    %v708 = vand.u32 %v707, 4294901760
    %709 = vmatpush1.msra.mxu0 %v708
    %v710 = vand.u32 %v435, 4294901760
    %v711 = vsub.f32 %v435, %v710
    %v712 = vand.u32 %v711, 4294901760
    %v713 = vsub.f32 %v711, %v712
    %v714 = vand.u32 %v713, 4294901760
    %715 = vmatprep.subr.mxu0 %v714
    %v716 = vand.u32 %v434, 4294901760
    %v717 = vsub.f32 %v434, %v716
    %v718 = vand.u32 %v717, 4294901760
    %v719 = vsub.f32 %v717, %v718
    %v720 = vand.u32 %v719, 4294901760
    %721 = vmatpush1.msra.mxu0 %v720
    %v722 = vand.u32 %v433, 4294901760
    %v723 = vsub.f32 %v433, %v722
    %v724 = vand.u32 %v723, 4294901760
    %v725 = vsub.f32 %v723, %v724
    %v726 = vand.u32 %v725, 4294901760
    %727 = vmatprep.subr.mxu0 %v726
    %v728 = vand.u32 %v432, 4294901760
    %v729 = vsub.f32 %v432, %v728
    %v730 = vand.u32 %v729, 4294901760
    %v731 = vsub.f32 %v729, %v730
    %v732 = vand.u32 %v731, 4294901760
    %733 = vmatpush1.msra.mxu0 %v732
    %v734 = vand.u32 %v431, 4294901760
    %v735 = vsub.f32 %v431, %v734
    %v736 = vand.u32 %v735, 4294901760
    %v737 = vsub.f32 %v735, %v736
    %v738 = vand.u32 %v737, 4294901760
    %739 = vmatprep.subr.mxu0 %v738
    %v740 = vand.u32 %v430, 4294901760
    %v741 = vsub.f32 %v430, %v740
    %v742 = vand.u32 %v741, 4294901760
    %v743 = vsub.f32 %v741, %v742
    %v744 = vand.u32 %v743, 4294901760
    %745 = vmatpush1.msra.mxu0 %v744
    %v746 = vand.u32 %v429, 4294901760
    %v747 = vsub.f32 %v429, %v746
    %v748 = vand.u32 %v747, 4294901760
    %v749 = vsub.f32 %v747, %v748
    %v750 = vand.u32 %v749, 4294901760
    %751 = vmatprep.subr.mxu0 %v750
    %v752 = vand.u32 %v428, 4294901760
    %v753 = vsub.f32 %v428, %v752
    %v754 = vand.u32 %v753, 4294901760
    %v755 = vsub.f32 %v753, %v754
    %v756 = vand.u32 %v755, 4294901760
    %757 = vmatpush1.msra.mxu0 %v756
    %v758 = vand.u32 %v427, 4294901760
    %v759 = vsub.f32 %v427, %v758
    %v760 = vand.u32 %v759, 4294901760
    %v761 = vsub.f32 %v759, %v760
    %v762 = vand.u32 %v761, 4294901760
    %763 = vmatprep.subr.mxu0 %v762
    %v764 = vand.u32 %v426, 4294901760
    %v765 = vsub.f32 %v426, %v764
    %v766 = vand.u32 %v765, 4294901760
    %v767 = vsub.f32 %v765, %v766
    %v768 = vand.u32 %v767, 4294901760
    %769 = vmatpush1.msra.mxu0 %v768
    %v770 = vand.u32 %v425, 4294901760
    %v771 = vsub.f32 %v425, %v770
    %v772 = vand.u32 %v771, 4294901760
    %v773 = vsub.f32 %v771, %v772
    %v774 = vand.u32 %v773, 4294901760
    %775 = vmatprep.subr.mxu0 %v774
    %v776 = vand.u32 %v424, 4294901760
    %v777 = vsub.f32 %v424, %v776
    %v778 = vand.u32 %v777, 4294901760
    %v779 = vsub.f32 %v777, %v778
    %v780 = vand.u32 %v779, 4294901760
    %781 = vmatpush1.msra.mxu0 %v780
    %v782 = vand.u32 %v423, 4294901760
    %v783 = vsub.f32 %v423, %v782
    %v784 = vand.u32 %v783, 4294901760
    %v785 = vsub.f32 %v783, %v784
    %v786 = vand.u32 %v785, 4294901760
    %787 = vmatprep.subr.mxu0 %v786
    %v788 = vand.u32 %v422, 4294901760
    %v789 = vsub.f32 %v422, %v788
    %v790 = vand.u32 %v789, 4294901760
    %v791 = vsub.f32 %v789, %v790
    %v792 = vand.u32 %v791, 4294901760
    %793 = vmatpush1.msra.mxu0 %v792
    %v794 = vand.u32 %v421, 4294901760
    %v795 = vsub.f32 %v421, %v794
    %v796 = vand.u32 %v795, 4294901760
    %v797 = vsub.f32 %v795, %v796
    %v798 = vand.u32 %v797, 4294901760
    %799 = vmatprep.subr.mxu0 %v798
    %v800 = vand.u32 %v420, 4294901760
    %v801 = vsub.f32 %v420, %v800
    %v802 = vand.u32 %v801, 4294901760
    %v803 = vsub.f32 %v801, %v802
    %v804 = vand.u32 %v803, 4294901760
    %805 = vmatpush1.msra.mxu0 %v804
    %v806 = vand.u32 %v419, 4294901760
    %v807 = vsub.f32 %v419, %v806
    %v808 = vand.u32 %v807, 4294901760
    %v809 = vsub.f32 %v807, %v808
    %v810 = vand.u32 %v809, 4294901760
    %811 = vmatprep.subr.mxu0 %v810
    %v812 = vand.u32 %v418, 4294901760
    %v813 = vsub.f32 %v418, %v812
    %v814 = vand.u32 %v813, 4294901760
    %v815 = vsub.f32 %v813, %v814
    %v816 = vand.u32 %v815, 4294901760
    %817 = vmatpush1.msra.mxu0 %v816
    %v818 = vand.u32 %v417, 4294901760
    %v819 = vsub.f32 %v417, %v818
    %v820 = vand.u32 %v819, 4294901760
    %v821 = vsub.f32 %v819, %v820
    %v822 = vand.u32 %v821, 4294901760
    %823 = vmatprep.subr.mxu0 %v822
    %v824 = vand.u32 %v416, 4294901760
    %v825 = vsub.f32 %v416, %v824
    %v826 = vand.u32 %v825, 4294901760
    %v827 = vsub.f32 %v825, %v826
    %v828 = vand.u32 %v827, 4294901760
    %829 = vmatpush1.msra.mxu0 %v828
    %v830 = vand.u32 %v479, 4294901760
    %v831 = vsub.f32 %v479, %v830
    %v832 = vand.u32 %v831, 4294901760
    %v833 = vsub.f32 %v831, %v832
    %v834 = vand.u32 %v833, 4294901760
    %835 = vmatprep.subr.mxu0 %v834
    %v836 = vand.u32 %v478, 4294901760
    %v837 = vsub.f32 %v478, %v836
    %v838 = vand.u32 %v837, 4294901760
    %v839 = vsub.f32 %v837, %v838
    %v840 = vand.u32 %v839, 4294901760
    %841 = vmatpush2.msra.mxu0 %v840
    %v842 = vand.u32 %v477, 4294901760
    %v843 = vsub.f32 %v477, %v842
    %v844 = vand.u32 %v843, 4294901760
    %v845 = vsub.f32 %v843, %v844
    %v846 = vand.u32 %v845, 4294901760
    %847 = vmatprep.subr.mxu0 %v846
    %v848 = vand.u32 %v476, 4294901760
    %v849 = vsub.f32 %v476, %v848
    %v850 = vand.u32 %v849, 4294901760
    %v851 = vsub.f32 %v849, %v850
    %v852 = vand.u32 %v851, 4294901760
    %853 = vmatpush2.msra.mxu0 %v852
    %v854 = vand.u32 %v475, 4294901760
    %v855 = vsub.f32 %v475, %v854
    %v856 = vand.u32 %v855, 4294901760
    %v857 = vsub.f32 %v855, %v856
    %v858 = vand.u32 %v857, 4294901760
    %859 = vmatprep.subr.mxu0 %v858
    %v860 = vand.u32 %v474, 4294901760
    %v861 = vsub.f32 %v474, %v860
    %v862 = vand.u32 %v861, 4294901760
    %v863 = vsub.f32 %v861, %v862
    %v864 = vand.u32 %v863, 4294901760
    %865 = vmatpush2.msra.mxu0 %v864
    %v866 = vand.u32 %v473, 4294901760
    %v867 = vsub.f32 %v473, %v866
    %v868 = vand.u32 %v867, 4294901760
    %v869 = vsub.f32 %v867, %v868
    %v870 = vand.u32 %v869, 4294901760
    %871 = vmatprep.subr.mxu0 %v870
    %v872 = vand.u32 %v472, 4294901760
    %v873 = vsub.f32 %v472, %v872
    %v874 = vand.u32 %v873, 4294901760
    %v875 = vsub.f32 %v873, %v874
    %v876 = vand.u32 %v875, 4294901760
    %877 = vmatpush2.msra.mxu0 %v876
    %v878 = vand.u32 %v471, 4294901760
    %v879 = vsub.f32 %v471, %v878
    %v880 = vand.u32 %v879, 4294901760
    %v881 = vsub.f32 %v879, %v880
    %v882 = vand.u32 %v881, 4294901760
    %883 = vmatprep.subr.mxu0 %v882
    %v884 = vand.u32 %v470, 4294901760
    %v885 = vsub.f32 %v470, %v884
    %v886 = vand.u32 %v885, 4294901760
    %v887 = vsub.f32 %v885, %v886
    %v888 = vand.u32 %v887, 4294901760
    %889 = vmatpush2.msra.mxu0 %v888
    %v890 = vand.u32 %v469, 4294901760
    %v891 = vsub.f32 %v469, %v890
    %v892 = vand.u32 %v891, 4294901760
    %v893 = vsub.f32 %v891, %v892
    %v894 = vand.u32 %v893, 4294901760
    %895 = vmatprep.subr.mxu0 %v894
    %v896 = vand.u32 %v468, 4294901760
    %v897 = vsub.f32 %v468, %v896
    %v898 = vand.u32 %v897, 4294901760
    %v899 = vsub.f32 %v897, %v898
    %v900 = vand.u32 %v899, 4294901760
    %901 = vmatpush2.msra.mxu0 %v900
    %v902 = vand.u32 %v467, 4294901760
    %v903 = vsub.f32 %v467, %v902
    %v904 = vand.u32 %v903, 4294901760
    %v905 = vsub.f32 %v903, %v904
    %v906 = vand.u32 %v905, 4294901760
    %907 = vmatprep.subr.mxu0 %v906
    %v908 = vand.u32 %v466, 4294901760
    %v909 = vsub.f32 %v466, %v908
    %v910 = vand.u32 %v909, 4294901760
    %v911 = vsub.f32 %v909, %v910
    %v912 = vand.u32 %v911, 4294901760
    %913 = vmatpush2.msra.mxu0 %v912
    %v914 = vand.u32 %v465, 4294901760
    %v915 = vsub.f32 %v465, %v914
    %v916 = vand.u32 %v915, 4294901760
    %v917 = vsub.f32 %v915, %v916
    %v918 = vand.u32 %v917, 4294901760
    %919 = vmatprep.subr.mxu0 %v918
    %v920 = vand.u32 %v464, 4294901760
    %v921 = vsub.f32 %v464, %v920
    %v922 = vand.u32 %v921, 4294901760
    %v923 = vsub.f32 %v921, %v922
    %v924 = vand.u32 %v923, 4294901760
    %925 = vmatpush2.msra.mxu0 %v924
    %v926 = vand.u32 %v463, 4294901760
    %v927 = vsub.f32 %v463, %v926
    %v928 = vand.u32 %v927, 4294901760
    %v929 = vsub.f32 %v927, %v928
    %v930 = vand.u32 %v929, 4294901760
    %931 = vmatprep.subr.mxu0 %v930
    %v932 = vand.u32 %v462, 4294901760
    %v933 = vsub.f32 %v462, %v932
    %v934 = vand.u32 %v933, 4294901760
    %v935 = vsub.f32 %v933, %v934
    %v936 = vand.u32 %v935, 4294901760
    %937 = vmatpush2.msra.mxu0 %v936
    %v938 = vand.u32 %v461, 4294901760
    %v939 = vsub.f32 %v461, %v938
    %v940 = vand.u32 %v939, 4294901760
    %v941 = vsub.f32 %v939, %v940
    %v942 = vand.u32 %v941, 4294901760
    %943 = vmatprep.subr.mxu0 %v942
    %v944 = vand.u32 %v460, 4294901760
    %v945 = vsub.f32 %v460, %v944
    %v946 = vand.u32 %v945, 4294901760
    %v947 = vsub.f32 %v945, %v946
    %v948 = vand.u32 %v947, 4294901760
    %949 = vmatpush2.msra.mxu0 %v948
    %v950 = vand.u32 %v459, 4294901760
    %v951 = vsub.f32 %v459, %v950
    %v952 = vand.u32 %v951, 4294901760
    %v953 = vsub.f32 %v951, %v952
    %v954 = vand.u32 %v953, 4294901760
    %955 = vmatprep.subr.mxu0 %v954
    %v956 = vand.u32 %v458, 4294901760
    %v957 = vsub.f32 %v458, %v956
    %v958 = vand.u32 %v957, 4294901760
    %v959 = vsub.f32 %v957, %v958
    %v960 = vand.u32 %v959, 4294901760
    %961 = vmatpush2.msra.mxu0 %v960
    %v962 = vand.u32 %v457, 4294901760
    %v963 = vsub.f32 %v457, %v962
    %v964 = vand.u32 %v963, 4294901760
    %v965 = vsub.f32 %v963, %v964
    %v966 = vand.u32 %v965, 4294901760
    %967 = vmatprep.subr.mxu0 %v966
    %v968 = vand.u32 %v456, 4294901760
    %v969 = vsub.f32 %v456, %v968
    %v970 = vand.u32 %v969, 4294901760
    %v971 = vsub.f32 %v969, %v970
    %v972 = vand.u32 %v971, 4294901760
    %973 = vmatpush2.msra.mxu0 %v972
    %v974 = vand.u32 %v455, 4294901760
    %v975 = vsub.f32 %v455, %v974
    %v976 = vand.u32 %v975, 4294901760
    %v977 = vsub.f32 %v975, %v976
    %v978 = vand.u32 %v977, 4294901760
    %979 = vmatprep.subr.mxu0 %v978
    %v980 = vand.u32 %v454, 4294901760
    %v981 = vsub.f32 %v454, %v980
    %v982 = vand.u32 %v981, 4294901760
    %v983 = vsub.f32 %v981, %v982
    %v984 = vand.u32 %v983, 4294901760
    %985 = vmatpush2.msra.mxu0 %v984
    %v986 = vand.u32 %v453, 4294901760
    %v987 = vsub.f32 %v453, %v986
    %v988 = vand.u32 %v987, 4294901760
    %v989 = vsub.f32 %v987, %v988
    %v990 = vand.u32 %v989, 4294901760
    %991 = vmatprep.subr.mxu0 %v990
    %v992 = vand.u32 %v452, 4294901760
    %v993 = vsub.f32 %v452, %v992
    %v994 = vand.u32 %v993, 4294901760
    %v995 = vsub.f32 %v993, %v994
    %v996 = vand.u32 %v995, 4294901760
    %997 = vmatpush2.msra.mxu0 %v996
    %v998 = vand.u32 %v451, 4294901760
    %v999 = vsub.f32 %v451, %v998
    %v1000 = vand.u32 %v999, 4294901760
    %v1001 = vsub.f32 %v999, %v1000
    %v1002 = vand.u32 %v1001, 4294901760
    %1003 = vmatprep.subr.mxu0 %v1002
    %v1004 = vand.u32 %v450, 4294901760
    %v1005 = vsub.f32 %v450, %v1004
    %v1006 = vand.u32 %v1005, 4294901760
    %v1007 = vsub.f32 %v1005, %v1006
    %v1008 = vand.u32 %v1007, 4294901760
    %1009 = vmatpush2.msra.mxu0 %v1008
    %v1010 = vand.u32 %v449, 4294901760
    %v1011 = vsub.f32 %v449, %v1010
    %v1012 = vand.u32 %v1011, 4294901760
    %v1013 = vsub.f32 %v1011, %v1012
    %v1014 = vand.u32 %v1013, 4294901760
    %1015 = vmatprep.subr.mxu0 %v1014
    %v1016 = vand.u32 %v448, 4294901760
    %v1017 = vsub.f32 %v448, %v1016
    %v1018 = vand.u32 %v1017, 4294901760
    %v1019 = vsub.f32 %v1017, %v1018
    %v1020 = vand.u32 %v1019, 4294901760
    %1021 = vmatpush2.msra.mxu0 %v1020
    %v1022 = vand.u32 %v490, 4294901760
    %1023 = vmatprep.mubr.f32.mxu0 %v1022
    %v1024 = vand.u32 %v489, 4294901760
    %1025 = vmatmul.mubr.f32.gmra.mxu0 %v1024
    %v1026 = vpop.f32.mrf.mxu0
    %v1027 = vadd.f32 %v634, %v1026
    %v1028 = vpop.f32.mrf.mxu0
    %v1029 = vadd.f32 %v636, %v1028
    %1030 = vdwg.mxu0
    %v1031 = vand.u32 %v447, 4294901760
    %v1032 = vsub.f32 %v447, %v1031
    %1033 = vmatprep.subr.mxu0 %v1032
    %v1034 = vand.u32 %v446, 4294901760
    %v1035 = vsub.f32 %v446, %v1034
    %1036 = vmatpush1.msra.mxu0 %v1035
    %v1037 = vand.u32 %v445, 4294901760
    %v1038 = vsub.f32 %v445, %v1037
    %1039 = vmatprep.subr.mxu0 %v1038
    %v1040 = vand.u32 %v444, 4294901760
    %v1041 = vsub.f32 %v444, %v1040
    %1042 = vmatpush1.msra.mxu0 %v1041
    %v1043 = vand.u32 %v443, 4294901760
    %v1044 = vsub.f32 %v443, %v1043
    %1045 = vmatprep.subr.mxu0 %v1044
    %v1046 = vand.u32 %v442, 4294901760
    %v1047 = vsub.f32 %v442, %v1046
    %1048 = vmatpush1.msra.mxu0 %v1047
    %v1049 = vand.u32 %v441, 4294901760
    %v1050 = vsub.f32 %v441, %v1049
    %1051 = vmatprep.subr.mxu0 %v1050
    %v1052 = vand.u32 %v440, 4294901760
    %v1053 = vsub.f32 %v440, %v1052
    %1054 = vmatpush1.msra.mxu0 %v1053
    %v1055 = vand.u32 %v439, 4294901760
    %v1056 = vsub.f32 %v439, %v1055
    %1057 = vmatprep.subr.mxu0 %v1056
    %v1058 = vand.u32 %v438, 4294901760
    %v1059 = vsub.f32 %v438, %v1058
    %1060 = vmatpush1.msra.mxu0 %v1059
    %v1061 = vand.u32 %v437, 4294901760
    %v1062 = vsub.f32 %v437, %v1061
    %1063 = vmatprep.subr.mxu0 %v1062
    %v1064 = vand.u32 %v436, 4294901760
    %v1065 = vsub.f32 %v436, %v1064
    %1066 = vmatpush1.msra.mxu0 %v1065
    %v1067 = vand.u32 %v435, 4294901760
    %v1068 = vsub.f32 %v435, %v1067
    %1069 = vmatprep.subr.mxu0 %v1068
    %v1070 = vand.u32 %v434, 4294901760
    %v1071 = vsub.f32 %v434, %v1070
    %1072 = vmatpush1.msra.mxu0 %v1071
    %v1073 = vand.u32 %v433, 4294901760
    %v1074 = vsub.f32 %v433, %v1073
    %1075 = vmatprep.subr.mxu0 %v1074
    %v1076 = vand.u32 %v432, 4294901760
    %v1077 = vsub.f32 %v432, %v1076
    %1078 = vmatpush1.msra.mxu0 %v1077
    %v1079 = vand.u32 %v431, 4294901760
    %v1080 = vsub.f32 %v431, %v1079
    %1081 = vmatprep.subr.mxu0 %v1080
    %v1082 = vand.u32 %v430, 4294901760
    %v1083 = vsub.f32 %v430, %v1082
    %1084 = vmatpush1.msra.mxu0 %v1083
    %v1085 = vand.u32 %v429, 4294901760
    %v1086 = vsub.f32 %v429, %v1085
    %1087 = vmatprep.subr.mxu0 %v1086
    %v1088 = vand.u32 %v428, 4294901760
    %v1089 = vsub.f32 %v428, %v1088
    %1090 = vmatpush1.msra.mxu0 %v1089
    %v1091 = vand.u32 %v427, 4294901760
    %v1092 = vsub.f32 %v427, %v1091
    %1093 = vmatprep.subr.mxu0 %v1092
    %v1094 = vand.u32 %v426, 4294901760
    %v1095 = vsub.f32 %v426, %v1094
    %1096 = vmatpush1.msra.mxu0 %v1095
    %v1097 = vand.u32 %v425, 4294901760
    %v1098 = vsub.f32 %v425, %v1097
    %1099 = vmatprep.subr.mxu0 %v1098
    %v1100 = vand.u32 %v424, 4294901760
    %v1101 = vsub.f32 %v424, %v1100
    %1102 = vmatpush1.msra.mxu0 %v1101
    %v1103 = vand.u32 %v423, 4294901760
    %v1104 = vsub.f32 %v423, %v1103
    %1105 = vmatprep.subr.mxu0 %v1104
    %v1106 = vand.u32 %v422, 4294901760
    %v1107 = vsub.f32 %v422, %v1106
    %1108 = vmatpush1.msra.mxu0 %v1107
    %v1109 = vand.u32 %v421, 4294901760
    %v1110 = vsub.f32 %v421, %v1109
    %1111 = vmatprep.subr.mxu0 %v1110
    %v1112 = vand.u32 %v420, 4294901760
    %v1113 = vsub.f32 %v420, %v1112
    %1114 = vmatpush1.msra.mxu0 %v1113
    %v1115 = vand.u32 %v419, 4294901760
    %v1116 = vsub.f32 %v419, %v1115
    %1117 = vmatprep.subr.mxu0 %v1116
    %v1118 = vand.u32 %v418, 4294901760
    %v1119 = vsub.f32 %v418, %v1118
    %1120 = vmatpush1.msra.mxu0 %v1119
    %v1121 = vand.u32 %v417, 4294901760
    %v1122 = vsub.f32 %v417, %v1121
    %1123 = vmatprep.subr.mxu0 %v1122
    %v1124 = vand.u32 %v416, 4294901760
    %v1125 = vsub.f32 %v416, %v1124
    %1126 = vmatpush1.msra.mxu0 %v1125
    %v1127 = vand.u32 %v479, 4294901760
    %v1128 = vsub.f32 %v479, %v1127
    %1129 = vmatprep.subr.mxu0 %v1128
    %v1130 = vand.u32 %v478, 4294901760
    %v1131 = vsub.f32 %v478, %v1130
    %1132 = vmatpush2.msra.mxu0 %v1131
    %v1133 = vand.u32 %v477, 4294901760
    %v1134 = vsub.f32 %v477, %v1133
    %1135 = vmatprep.subr.mxu0 %v1134
    %v1136 = vand.u32 %v476, 4294901760
    %v1137 = vsub.f32 %v476, %v1136
    %1138 = vmatpush2.msra.mxu0 %v1137
    %v1139 = vand.u32 %v475, 4294901760
    %v1140 = vsub.f32 %v475, %v1139
    %1141 = vmatprep.subr.mxu0 %v1140
    %v1142 = vand.u32 %v474, 4294901760
    %v1143 = vsub.f32 %v474, %v1142
    %1144 = vmatpush2.msra.mxu0 %v1143
    %v1145 = vand.u32 %v473, 4294901760
    %v1146 = vsub.f32 %v473, %v1145
    %1147 = vmatprep.subr.mxu0 %v1146
    %v1148 = vand.u32 %v472, 4294901760
    %v1149 = vsub.f32 %v472, %v1148
    %1150 = vmatpush2.msra.mxu0 %v1149
    %v1151 = vand.u32 %v471, 4294901760
    %v1152 = vsub.f32 %v471, %v1151
    %1153 = vmatprep.subr.mxu0 %v1152
    %v1154 = vand.u32 %v470, 4294901760
    %v1155 = vsub.f32 %v470, %v1154
    %1156 = vmatpush2.msra.mxu0 %v1155
    %v1157 = vand.u32 %v469, 4294901760
    %v1158 = vsub.f32 %v469, %v1157
    %1159 = vmatprep.subr.mxu0 %v1158
    %v1160 = vand.u32 %v468, 4294901760
    %v1161 = vsub.f32 %v468, %v1160
    %1162 = vmatpush2.msra.mxu0 %v1161
    %v1163 = vand.u32 %v467, 4294901760
    %v1164 = vsub.f32 %v467, %v1163
    %1165 = vmatprep.subr.mxu0 %v1164
    %v1166 = vand.u32 %v466, 4294901760
    %v1167 = vsub.f32 %v466, %v1166
    %1168 = vmatpush2.msra.mxu0 %v1167
    %v1169 = vand.u32 %v465, 4294901760
    %v1170 = vsub.f32 %v465, %v1169
    %1171 = vmatprep.subr.mxu0 %v1170
    %v1172 = vand.u32 %v464, 4294901760
    %v1173 = vsub.f32 %v464, %v1172
    %1174 = vmatpush2.msra.mxu0 %v1173
    %v1175 = vand.u32 %v463, 4294901760
    %v1176 = vsub.f32 %v463, %v1175
    %1177 = vmatprep.subr.mxu0 %v1176
    %v1178 = vand.u32 %v462, 4294901760
    %v1179 = vsub.f32 %v462, %v1178
    %1180 = vmatpush2.msra.mxu0 %v1179
    %v1181 = vand.u32 %v461, 4294901760
    %v1182 = vsub.f32 %v461, %v1181
    %1183 = vmatprep.subr.mxu0 %v1182
    %v1184 = vand.u32 %v460, 4294901760
    %v1185 = vsub.f32 %v460, %v1184
    %1186 = vmatpush2.msra.mxu0 %v1185
    %v1187 = vand.u32 %v459, 4294901760
    %v1188 = vsub.f32 %v459, %v1187
    %1189 = vmatprep.subr.mxu0 %v1188
    %v1190 = vand.u32 %v458, 4294901760
    %v1191 = vsub.f32 %v458, %v1190
    %1192 = vmatpush2.msra.mxu0 %v1191
    %v1193 = vand.u32 %v457, 4294901760
    %v1194 = vsub.f32 %v457, %v1193
    %1195 = vmatprep.subr.mxu0 %v1194
    %v1196 = vand.u32 %v456, 4294901760
    %v1197 = vsub.f32 %v456, %v1196
    %1198 = vmatpush2.msra.mxu0 %v1197
    %v1199 = vand.u32 %v455, 4294901760
    %v1200 = vsub.f32 %v455, %v1199
    %1201 = vmatprep.subr.mxu0 %v1200
    %v1202 = vand.u32 %v454, 4294901760
    %v1203 = vsub.f32 %v454, %v1202
    %1204 = vmatpush2.msra.mxu0 %v1203
    %v1205 = vand.u32 %v453, 4294901760
    %v1206 = vsub.f32 %v453, %v1205
    %1207 = vmatprep.subr.mxu0 %v1206
    %v1208 = vand.u32 %v452, 4294901760
    %v1209 = vsub.f32 %v452, %v1208
    %1210 = vmatpush2.msra.mxu0 %v1209
    %v1211 = vand.u32 %v451, 4294901760
    %v1212 = vsub.f32 %v451, %v1211
    %1213 = vmatprep.subr.mxu0 %v1212
    %v1214 = vand.u32 %v450, 4294901760
    %v1215 = vsub.f32 %v450, %v1214
    %1216 = vmatpush2.msra.mxu0 %v1215
    %v1217 = vand.u32 %v449, 4294901760
    %v1218 = vsub.f32 %v449, %v1217
    %1219 = vmatprep.subr.mxu0 %v1218
    %v1220 = vand.u32 %v448, 4294901760
    %v1221 = vsub.f32 %v448, %v1220
    %1222 = vmatpush2.msra.mxu0 %v1221
    %v1223 = vand.u32 %v490, 4294901760
    %v1224 = vsub.f32 %v490, %v1223
    %1225 = vmatprep.mubr.f32.mxu0 %v1224
    %v1226 = vand.u32 %v489, 4294901760
    %v1227 = vsub.f32 %v489, %v1226
    %1228 = vmatmul.mubr.f32.gmra.mxu0 %v1227
    %v1229 = vpop.f32.mrf.mxu0
    %v1230 = vadd.f32 %v1027, %v1229
    %v1231 = vpop.f32.mrf.mxu0
    %v1232 = vadd.f32 %v1029, %v1231
    %1233 = vdwg.mxu0
    %v1234 = vand.u32 %v447, 4294901760
    %1235 = vmatprep.subr.mxu0 %v1234
    %v1236 = vand.u32 %v446, 4294901760
    %1237 = vmatpush1.msra.mxu0 %v1236
    %v1238 = vand.u32 %v445, 4294901760
    %1239 = vmatprep.subr.mxu0 %v1238
    %v1240 = vand.u32 %v444, 4294901760
    %1241 = vmatpush1.msra.mxu0 %v1240
    %v1242 = vand.u32 %v443, 4294901760
    %1243 = vmatprep.subr.mxu0 %v1242
    %v1244 = vand.u32 %v442, 4294901760
    %1245 = vmatpush1.msra.mxu0 %v1244
    %v1246 = vand.u32 %v441, 4294901760
    %1247 = vmatprep.subr.mxu0 %v1246
    %v1248 = vand.u32 %v440, 4294901760
    %1249 = vmatpush1.msra.mxu0 %v1248
    %v1250 = vand.u32 %v439, 4294901760
    %1251 = vmatprep.subr.mxu0 %v1250
    %v1252 = vand.u32 %v438, 4294901760
    %1253 = vmatpush1.msra.mxu0 %v1252
    %v1254 = vand.u32 %v437, 4294901760
    %1255 = vmatprep.subr.mxu0 %v1254
    %v1256 = vand.u32 %v436, 4294901760
    %1257 = vmatpush1.msra.mxu0 %v1256
    %v1258 = vand.u32 %v435, 4294901760
    %1259 = vmatprep.subr.mxu0 %v1258
    %v1260 = vand.u32 %v434, 4294901760
    %1261 = vmatpush1.msra.mxu0 %v1260
    %v1262 = vand.u32 %v433, 4294901760
    %1263 = vmatprep.subr.mxu0 %v1262
    %v1264 = vand.u32 %v432, 4294901760
    %1265 = vmatpush1.msra.mxu0 %v1264
    %v1266 = vand.u32 %v431, 4294901760
    %1267 = vmatprep.subr.mxu0 %v1266
    %v1268 = vand.u32 %v430, 4294901760
    %1269 = vmatpush1.msra.mxu0 %v1268
    %v1270 = vand.u32 %v429, 4294901760
    %1271 = vmatprep.subr.mxu0 %v1270
    %v1272 = vand.u32 %v428, 4294901760
    %1273 = vmatpush1.msra.mxu0 %v1272
    %v1274 = vand.u32 %v427, 4294901760
    %1275 = vmatprep.subr.mxu0 %v1274
    %v1276 = vand.u32 %v426, 4294901760
    %1277 = vmatpush1.msra.mxu0 %v1276
    %v1278 = vand.u32 %v425, 4294901760
    %1279 = vmatprep.subr.mxu0 %v1278
    %v1280 = vand.u32 %v424, 4294901760
    %1281 = vmatpush1.msra.mxu0 %v1280
    %v1282 = vand.u32 %v423, 4294901760
    %1283 = vmatprep.subr.mxu0 %v1282
    %v1284 = vand.u32 %v422, 4294901760
    %1285 = vmatpush1.msra.mxu0 %v1284
    %v1286 = vand.u32 %v421, 4294901760
    %1287 = vmatprep.subr.mxu0 %v1286
    %v1288 = vand.u32 %v420, 4294901760
    %1289 = vmatpush1.msra.mxu0 %v1288
    %v1290 = vand.u32 %v419, 4294901760
    %1291 = vmatprep.subr.mxu0 %v1290
    %v1292 = vand.u32 %v418, 4294901760
    %1293 = vmatpush1.msra.mxu0 %v1292
    %v1294 = vand.u32 %v417, 4294901760
    %1295 = vmatprep.subr.mxu0 %v1294
    %v1296 = vand.u32 %v416, 4294901760
    %1297 = vmatpush1.msra.mxu0 %v1296
    %v1298 = vand.u32 %v479, 4294901760
    %1299 = vmatprep.subr.mxu0 %v1298
    %v1300 = vand.u32 %v478, 4294901760
    %1301 = vmatpush2.msra.mxu0 %v1300
    %v1302 = vand.u32 %v477, 4294901760
    %1303 = vmatprep.subr.mxu0 %v1302
    %v1304 = vand.u32 %v476, 4294901760
    %1305 = vmatpush2.msra.mxu0 %v1304
    %v1306 = vand.u32 %v475, 4294901760
    %1307 = vmatprep.subr.mxu0 %v1306
    %v1308 = vand.u32 %v474, 4294901760
    %1309 = vmatpush2.msra.mxu0 %v1308
    %v1310 = vand.u32 %v473, 4294901760
    %1311 = vmatprep.subr.mxu0 %v1310
    %v1312 = vand.u32 %v472, 4294901760
    %1313 = vmatpush2.msra.mxu0 %v1312
    %v1314 = vand.u32 %v471, 4294901760
    %1315 = vmatprep.subr.mxu0 %v1314
    %v1316 = vand.u32 %v470, 4294901760
    %1317 = vmatpush2.msra.mxu0 %v1316
    %v1318 = vand.u32 %v469, 4294901760
    %1319 = vmatprep.subr.mxu0 %v1318
    %v1320 = vand.u32 %v468, 4294901760
    %1321 = vmatpush2.msra.mxu0 %v1320
    %v1322 = vand.u32 %v467, 4294901760
    %1323 = vmatprep.subr.mxu0 %v1322
    %v1324 = vand.u32 %v466, 4294901760
    %1325 = vmatpush2.msra.mxu0 %v1324
    %v1326 = vand.u32 %v465, 4294901760
    %1327 = vmatprep.subr.mxu0 %v1326
    %v1328 = vand.u32 %v464, 4294901760
    %1329 = vmatpush2.msra.mxu0 %v1328
    %v1330 = vand.u32 %v463, 4294901760
    %1331 = vmatprep.subr.mxu0 %v1330
    %v1332 = vand.u32 %v462, 4294901760
    %1333 = vmatpush2.msra.mxu0 %v1332
    %v1334 = vand.u32 %v461, 4294901760
    %1335 = vmatprep.subr.mxu0 %v1334
    %v1336 = vand.u32 %v460, 4294901760
    %1337 = vmatpush2.msra.mxu0 %v1336
    %v1338 = vand.u32 %v459, 4294901760
    %1339 = vmatprep.subr.mxu0 %v1338
    %v1340 = vand.u32 %v458, 4294901760
    %1341 = vmatpush2.msra.mxu0 %v1340
    %v1342 = vand.u32 %v457, 4294901760
    %1343 = vmatprep.subr.mxu0 %v1342
    %v1344 = vand.u32 %v456, 4294901760
    %1345 = vmatpush2.msra.mxu0 %v1344
    %v1346 = vand.u32 %v455, 4294901760
    %1347 = vmatprep.subr.mxu0 %v1346
    %v1348 = vand.u32 %v454, 4294901760
    %1349 = vmatpush2.msra.mxu0 %v1348
    %v1350 = vand.u32 %v453, 4294901760
    %1351 = vmatprep.subr.mxu0 %v1350
    %v1352 = vand.u32 %v452, 4294901760
    %1353 = vmatpush2.msra.mxu0 %v1352
    %v1354 = vand.u32 %v451, 4294901760
    %1355 = vmatprep.subr.mxu0 %v1354
    %v1356 = vand.u32 %v450, 4294901760
    %1357 = vmatpush2.msra.mxu0 %v1356
    %v1358 = vand.u32 %v449, 4294901760
    %1359 = vmatprep.subr.mxu0 %v1358
    %v1360 = vand.u32 %v448, 4294901760
    %1361 = vmatpush2.msra.mxu0 %v1360
    %v1362 = vand.u32 %v490, 4294901760
    %v1363 = vsub.f32 %v490, %v1362
    %v1364 = vand.u32 %v1363, 4294901760
    %1365 = vmatprep.mubr.f32.mxu0 %v1364
    %v1366 = vand.u32 %v489, 4294901760
    %v1367 = vsub.f32 %v489, %v1366
    %v1368 = vand.u32 %v1367, 4294901760
    %1369 = vmatmul.mubr.f32.gmra.mxu0 %v1368
    %v1370 = vpop.f32.mrf.mxu0
    %v1371 = vadd.f32 %v1230, %v1370
    %v1372 = vpop.f32.mrf.mxu0
    %v1373 = vadd.f32 %v1232, %v1372
    %1374 = vdwg.mxu0
    %v1375 = vand.u32 %v447, 4294901760
    %v1376 = vsub.f32 %v447, %v1375
    %v1377 = vand.u32 %v1376, 4294901760
    %1378 = vmatprep.subr.mxu0 %v1377
    %v1379 = vand.u32 %v446, 4294901760
    %v1380 = vsub.f32 %v446, %v1379
    %v1381 = vand.u32 %v1380, 4294901760
    %1382 = vmatpush1.msra.mxu0 %v1381
    %v1383 = vand.u32 %v445, 4294901760
    %v1384 = vsub.f32 %v445, %v1383
    %v1385 = vand.u32 %v1384, 4294901760
    %1386 = vmatprep.subr.mxu0 %v1385
    %v1387 = vand.u32 %v444, 4294901760
    %v1388 = vsub.f32 %v444, %v1387
    %v1389 = vand.u32 %v1388, 4294901760
    %1390 = vmatpush1.msra.mxu0 %v1389
    %v1391 = vand.u32 %v443, 4294901760
    %v1392 = vsub.f32 %v443, %v1391
    %v1393 = vand.u32 %v1392, 4294901760
    %1394 = vmatprep.subr.mxu0 %v1393
    %v1395 = vand.u32 %v442, 4294901760
    %v1396 = vsub.f32 %v442, %v1395
    %v1397 = vand.u32 %v1396, 4294901760
    %1398 = vmatpush1.msra.mxu0 %v1397
    %v1399 = vand.u32 %v441, 4294901760
    %v1400 = vsub.f32 %v441, %v1399
    %v1401 = vand.u32 %v1400, 4294901760
    %1402 = vmatprep.subr.mxu0 %v1401
    %v1403 = vand.u32 %v440, 4294901760
    %v1404 = vsub.f32 %v440, %v1403
    %v1405 = vand.u32 %v1404, 4294901760
    %1406 = vmatpush1.msra.mxu0 %v1405
    %v1407 = vand.u32 %v439, 4294901760
    %v1408 = vsub.f32 %v439, %v1407
    %v1409 = vand.u32 %v1408, 4294901760
    %1410 = vmatprep.subr.mxu0 %v1409
    %v1411 = vand.u32 %v438, 4294901760
    %v1412 = vsub.f32 %v438, %v1411
    %v1413 = vand.u32 %v1412, 4294901760
    %1414 = vmatpush1.msra.mxu0 %v1413
    %v1415 = vand.u32 %v437, 4294901760
    %v1416 = vsub.f32 %v437, %v1415
    %v1417 = vand.u32 %v1416, 4294901760
    %1418 = vmatprep.subr.mxu0 %v1417
    %v1419 = vand.u32 %v436, 4294901760
    %v1420 = vsub.f32 %v436, %v1419
    %v1421 = vand.u32 %v1420, 4294901760
    %1422 = vmatpush1.msra.mxu0 %v1421
    %v1423 = vand.u32 %v435, 4294901760
    %v1424 = vsub.f32 %v435, %v1423
    %v1425 = vand.u32 %v1424, 4294901760
    %1426 = vmatprep.subr.mxu0 %v1425
    %v1427 = vand.u32 %v434, 4294901760
    %v1428 = vsub.f32 %v434, %v1427
    %v1429 = vand.u32 %v1428, 4294901760
    %1430 = vmatpush1.msra.mxu0 %v1429
    %v1431 = vand.u32 %v433, 4294901760
    %v1432 = vsub.f32 %v433, %v1431
    %v1433 = vand.u32 %v1432, 4294901760
    %1434 = vmatprep.subr.mxu0 %v1433
    %v1435 = vand.u32 %v432, 4294901760
    %v1436 = vsub.f32 %v432, %v1435
    %v1437 = vand.u32 %v1436, 4294901760
    %1438 = vmatpush1.msra.mxu0 %v1437
    %v1439 = vand.u32 %v431, 4294901760
    %v1440 = vsub.f32 %v431, %v1439
    %v1441 = vand.u32 %v1440, 4294901760
    %1442 = vmatprep.subr.mxu0 %v1441
    %v1443 = vand.u32 %v430, 4294901760
    %v1444 = vsub.f32 %v430, %v1443
    %v1445 = vand.u32 %v1444, 4294901760
    %1446 = vmatpush1.msra.mxu0 %v1445
    %v1447 = vand.u32 %v429, 4294901760
    %v1448 = vsub.f32 %v429, %v1447
    %v1449 = vand.u32 %v1448, 4294901760
    %1450 = vmatprep.subr.mxu0 %v1449
    %v1451 = vand.u32 %v428, 4294901760
    %v1452 = vsub.f32 %v428, %v1451
    %v1453 = vand.u32 %v1452, 4294901760
    %1454 = vmatpush1.msra.mxu0 %v1453
    %v1455 = vand.u32 %v427, 4294901760
    %v1456 = vsub.f32 %v427, %v1455
    %v1457 = vand.u32 %v1456, 4294901760
    %1458 = vmatprep.subr.mxu0 %v1457
    %v1459 = vand.u32 %v426, 4294901760
    %v1460 = vsub.f32 %v426, %v1459
    %v1461 = vand.u32 %v1460, 4294901760
    %1462 = vmatpush1.msra.mxu0 %v1461
    %v1463 = vand.u32 %v425, 4294901760
    %v1464 = vsub.f32 %v425, %v1463
    %v1465 = vand.u32 %v1464, 4294901760
    %1466 = vmatprep.subr.mxu0 %v1465
    %v1467 = vand.u32 %v424, 4294901760
    %v1468 = vsub.f32 %v424, %v1467
    %v1469 = vand.u32 %v1468, 4294901760
    %1470 = vmatpush1.msra.mxu0 %v1469
    %v1471 = vand.u32 %v423, 4294901760
    %v1472 = vsub.f32 %v423, %v1471
    %v1473 = vand.u32 %v1472, 4294901760
    %1474 = vmatprep.subr.mxu0 %v1473
    %v1475 = vand.u32 %v422, 4294901760
    %v1476 = vsub.f32 %v422, %v1475
    %v1477 = vand.u32 %v1476, 4294901760
    %1478 = vmatpush1.msra.mxu0 %v1477
    %v1479 = vand.u32 %v421, 4294901760
    %v1480 = vsub.f32 %v421, %v1479
    %v1481 = vand.u32 %v1480, 4294901760
    %1482 = vmatprep.subr.mxu0 %v1481
    %v1483 = vand.u32 %v420, 4294901760
    %v1484 = vsub.f32 %v420, %v1483
    %v1485 = vand.u32 %v1484, 4294901760
    %1486 = vmatpush1.msra.mxu0 %v1485
    %v1487 = vand.u32 %v419, 4294901760
    %v1488 = vsub.f32 %v419, %v1487
    %v1489 = vand.u32 %v1488, 4294901760
    %1490 = vmatprep.subr.mxu0 %v1489
    %v1491 = vand.u32 %v418, 4294901760
    %v1492 = vsub.f32 %v418, %v1491
    %v1493 = vand.u32 %v1492, 4294901760
    %1494 = vmatpush1.msra.mxu0 %v1493
    %v1495 = vand.u32 %v417, 4294901760
    %v1496 = vsub.f32 %v417, %v1495
    %v1497 = vand.u32 %v1496, 4294901760
    %1498 = vmatprep.subr.mxu0 %v1497
    %v1499 = vand.u32 %v416, 4294901760
    %v1500 = vsub.f32 %v416, %v1499
    %v1501 = vand.u32 %v1500, 4294901760
    %1502 = vmatpush1.msra.mxu0 %v1501
    %v1503 = vand.u32 %v479, 4294901760
    %v1504 = vsub.f32 %v479, %v1503
    %v1505 = vand.u32 %v1504, 4294901760
    %1506 = vmatprep.subr.mxu0 %v1505
    %v1507 = vand.u32 %v478, 4294901760
    %v1508 = vsub.f32 %v478, %v1507
    %v1509 = vand.u32 %v1508, 4294901760
    %1510 = vmatpush2.msra.mxu0 %v1509
    %v1511 = vand.u32 %v477, 4294901760
    %v1512 = vsub.f32 %v477, %v1511
    %v1513 = vand.u32 %v1512, 4294901760
    %1514 = vmatprep.subr.mxu0 %v1513
    %v1515 = vand.u32 %v476, 4294901760
    %v1516 = vsub.f32 %v476, %v1515
    %v1517 = vand.u32 %v1516, 4294901760
    %1518 = vmatpush2.msra.mxu0 %v1517
    %v1519 = vand.u32 %v475, 4294901760
    %v1520 = vsub.f32 %v475, %v1519
    %v1521 = vand.u32 %v1520, 4294901760
    %1522 = vmatprep.subr.mxu0 %v1521
    %v1523 = vand.u32 %v474, 4294901760
    %v1524 = vsub.f32 %v474, %v1523
    %v1525 = vand.u32 %v1524, 4294901760
    %1526 = vmatpush2.msra.mxu0 %v1525
    %v1527 = vand.u32 %v473, 4294901760
    %v1528 = vsub.f32 %v473, %v1527
    %v1529 = vand.u32 %v1528, 4294901760
    %1530 = vmatprep.subr.mxu0 %v1529
    %v1531 = vand.u32 %v472, 4294901760
    %v1532 = vsub.f32 %v472, %v1531
    %v1533 = vand.u32 %v1532, 4294901760
    %1534 = vmatpush2.msra.mxu0 %v1533
    %v1535 = vand.u32 %v471, 4294901760
    %v1536 = vsub.f32 %v471, %v1535
    %v1537 = vand.u32 %v1536, 4294901760
    %1538 = vmatprep.subr.mxu0 %v1537
    %v1539 = vand.u32 %v470, 4294901760
    %v1540 = vsub.f32 %v470, %v1539
    %v1541 = vand.u32 %v1540, 4294901760
    %1542 = vmatpush2.msra.mxu0 %v1541
    %v1543 = vand.u32 %v469, 4294901760
    %v1544 = vsub.f32 %v469, %v1543
    %v1545 = vand.u32 %v1544, 4294901760
    %1546 = vmatprep.subr.mxu0 %v1545
    %v1547 = vand.u32 %v468, 4294901760
    %v1548 = vsub.f32 %v468, %v1547
    %v1549 = vand.u32 %v1548, 4294901760
    %1550 = vmatpush2.msra.mxu0 %v1549
    %v1551 = vand.u32 %v467, 4294901760
    %v1552 = vsub.f32 %v467, %v1551
    %v1553 = vand.u32 %v1552, 4294901760
    %1554 = vmatprep.subr.mxu0 %v1553
    %v1555 = vand.u32 %v466, 4294901760
    %v1556 = vsub.f32 %v466, %v1555
    %v1557 = vand.u32 %v1556, 4294901760
    %1558 = vmatpush2.msra.mxu0 %v1557
    %v1559 = vand.u32 %v465, 4294901760
    %v1560 = vsub.f32 %v465, %v1559
    %v1561 = vand.u32 %v1560, 4294901760
    %1562 = vmatprep.subr.mxu0 %v1561
    %v1563 = vand.u32 %v464, 4294901760
    %v1564 = vsub.f32 %v464, %v1563
    %v1565 = vand.u32 %v1564, 4294901760
    %1566 = vmatpush2.msra.mxu0 %v1565
    %v1567 = vand.u32 %v463, 4294901760
    %v1568 = vsub.f32 %v463, %v1567
    %v1569 = vand.u32 %v1568, 4294901760
    %1570 = vmatprep.subr.mxu0 %v1569
    %v1571 = vand.u32 %v462, 4294901760
    %v1572 = vsub.f32 %v462, %v1571
    %v1573 = vand.u32 %v1572, 4294901760
    %1574 = vmatpush2.msra.mxu0 %v1573
    %v1575 = vand.u32 %v461, 4294901760
    %v1576 = vsub.f32 %v461, %v1575
    %v1577 = vand.u32 %v1576, 4294901760
    %1578 = vmatprep.subr.mxu0 %v1577
    %v1579 = vand.u32 %v460, 4294901760
    %v1580 = vsub.f32 %v460, %v1579
    %v1581 = vand.u32 %v1580, 4294901760
    %1582 = vmatpush2.msra.mxu0 %v1581
    %v1583 = vand.u32 %v459, 4294901760
    %v1584 = vsub.f32 %v459, %v1583
    %v1585 = vand.u32 %v1584, 4294901760
    %1586 = vmatprep.subr.mxu0 %v1585
    %v1587 = vand.u32 %v458, 4294901760
    %v1588 = vsub.f32 %v458, %v1587
    %v1589 = vand.u32 %v1588, 4294901760
    %1590 = vmatpush2.msra.mxu0 %v1589
    %v1591 = vand.u32 %v457, 4294901760
    %v1592 = vsub.f32 %v457, %v1591
    %v1593 = vand.u32 %v1592, 4294901760
    %1594 = vmatprep.subr.mxu0 %v1593
    %v1595 = vand.u32 %v456, 4294901760
    %v1596 = vsub.f32 %v456, %v1595
    %v1597 = vand.u32 %v1596, 4294901760
    %1598 = vmatpush2.msra.mxu0 %v1597
    %v1599 = vand.u32 %v455, 4294901760
    %v1600 = vsub.f32 %v455, %v1599
    %v1601 = vand.u32 %v1600, 4294901760
    %1602 = vmatprep.subr.mxu0 %v1601
    %v1603 = vand.u32 %v454, 4294901760
    %v1604 = vsub.f32 %v454, %v1603
    %v1605 = vand.u32 %v1604, 4294901760
    %1606 = vmatpush2.msra.mxu0 %v1605
    %v1607 = vand.u32 %v453, 4294901760
    %v1608 = vsub.f32 %v453, %v1607
    %v1609 = vand.u32 %v1608, 4294901760
    %1610 = vmatprep.subr.mxu0 %v1609
    %v1611 = vand.u32 %v452, 4294901760
    %v1612 = vsub.f32 %v452, %v1611
    %v1613 = vand.u32 %v1612, 4294901760
    %1614 = vmatpush2.msra.mxu0 %v1613
    %v1615 = vand.u32 %v451, 4294901760
    %v1616 = vsub.f32 %v451, %v1615
    %v1617 = vand.u32 %v1616, 4294901760
    %1618 = vmatprep.subr.mxu0 %v1617
    %v1619 = vand.u32 %v450, 4294901760
    %v1620 = vsub.f32 %v450, %v1619
    %v1621 = vand.u32 %v1620, 4294901760
    %1622 = vmatpush2.msra.mxu0 %v1621
    %v1623 = vand.u32 %v449, 4294901760
    %v1624 = vsub.f32 %v449, %v1623
    %v1625 = vand.u32 %v1624, 4294901760
    %1626 = vmatprep.subr.mxu0 %v1625
    %v1627 = vand.u32 %v448, 4294901760
    %v1628 = vsub.f32 %v448, %v1627
    %v1629 = vand.u32 %v1628, 4294901760
    %1630 = vmatpush2.msra.mxu0 %v1629
    %v1631 = vand.u32 %v490, 4294901760
    %1632 = vmatprep.mubr.f32.mxu0 %v1631
    %v1633 = vand.u32 %v489, 4294901760
    %1634 = vmatmul.mubr.f32.gmra.mxu0 %v1633
    %v1635 = vpop.f32.mrf.mxu0
    %v1636 = vadd.f32 %v1371, %v1635
    %v1637 = vpop.f32.mrf.mxu0
    %v1638 = vadd.f32 %v1373, %v1637
    %1639 = vdwg.mxu0
    %v1640 = vand.u32 %v447, 4294901760
    %1641 = vmatprep.subr.mxu0 %v1640
    %v1642 = vand.u32 %v446, 4294901760
    %1643 = vmatpush1.msra.mxu0 %v1642
    %v1644 = vand.u32 %v445, 4294901760
    %1645 = vmatprep.subr.mxu0 %v1644
    %v1646 = vand.u32 %v444, 4294901760
    %1647 = vmatpush1.msra.mxu0 %v1646
    %v1648 = vand.u32 %v443, 4294901760
    %1649 = vmatprep.subr.mxu0 %v1648
    %v1650 = vand.u32 %v442, 4294901760
    %1651 = vmatpush1.msra.mxu0 %v1650
    %v1652 = vand.u32 %v441, 4294901760
    %1653 = vmatprep.subr.mxu0 %v1652
    %v1654 = vand.u32 %v440, 4294901760
    %1655 = vmatpush1.msra.mxu0 %v1654
    %v1656 = vand.u32 %v439, 4294901760
    %1657 = vmatprep.subr.mxu0 %v1656
    %v1658 = vand.u32 %v438, 4294901760
    %1659 = vmatpush1.msra.mxu0 %v1658
    %v1660 = vand.u32 %v437, 4294901760
    %1661 = vmatprep.subr.mxu0 %v1660
    %v1662 = vand.u32 %v436, 4294901760
    %1663 = vmatpush1.msra.mxu0 %v1662
    %v1664 = vand.u32 %v435, 4294901760
    %1665 = vmatprep.subr.mxu0 %v1664
    %v1666 = vand.u32 %v434, 4294901760
    %1667 = vmatpush1.msra.mxu0 %v1666
    %v1668 = vand.u32 %v433, 4294901760
    %1669 = vmatprep.subr.mxu0 %v1668
    %v1670 = vand.u32 %v432, 4294901760
    %1671 = vmatpush1.msra.mxu0 %v1670
    %v1672 = vand.u32 %v431, 4294901760
    %1673 = vmatprep.subr.mxu0 %v1672
    %v1674 = vand.u32 %v430, 4294901760
    %1675 = vmatpush1.msra.mxu0 %v1674
    %v1676 = vand.u32 %v429, 4294901760
    %1677 = vmatprep.subr.mxu0 %v1676
    %v1678 = vand.u32 %v428, 4294901760
    %1679 = vmatpush1.msra.mxu0 %v1678
    %v1680 = vand.u32 %v427, 4294901760
    %1681 = vmatprep.subr.mxu0 %v1680
    %v1682 = vand.u32 %v426, 4294901760
    %1683 = vmatpush1.msra.mxu0 %v1682
    %v1684 = vand.u32 %v425, 4294901760
    %1685 = vmatprep.subr.mxu0 %v1684
    %v1686 = vand.u32 %v424, 4294901760
    %1687 = vmatpush1.msra.mxu0 %v1686
    %v1688 = vand.u32 %v423, 4294901760
    %1689 = vmatprep.subr.mxu0 %v1688
    %v1690 = vand.u32 %v422, 4294901760
    %1691 = vmatpush1.msra.mxu0 %v1690
    %v1692 = vand.u32 %v421, 4294901760
    %1693 = vmatprep.subr.mxu0 %v1692
    %v1694 = vand.u32 %v420, 4294901760
    %1695 = vmatpush1.msra.mxu0 %v1694
    %v1696 = vand.u32 %v419, 4294901760
    %1697 = vmatprep.subr.mxu0 %v1696
    %v1698 = vand.u32 %v418, 4294901760
    %1699 = vmatpush1.msra.mxu0 %v1698
    %v1700 = vand.u32 %v417, 4294901760
    %1701 = vmatprep.subr.mxu0 %v1700
    %v1702 = vand.u32 %v416, 4294901760
    %1703 = vmatpush1.msra.mxu0 %v1702
    %v1704 = vand.u32 %v479, 4294901760
    %1705 = vmatprep.subr.mxu0 %v1704
    %v1706 = vand.u32 %v478, 4294901760
    %1707 = vmatpush2.msra.mxu0 %v1706
    %v1708 = vand.u32 %v477, 4294901760
    %1709 = vmatprep.subr.mxu0 %v1708
    %v1710 = vand.u32 %v476, 4294901760
    %1711 = vmatpush2.msra.mxu0 %v1710
    %v1712 = vand.u32 %v475, 4294901760
    %1713 = vmatprep.subr.mxu0 %v1712
    %v1714 = vand.u32 %v474, 4294901760
    %1715 = vmatpush2.msra.mxu0 %v1714
    %v1716 = vand.u32 %v473, 4294901760
    %1717 = vmatprep.subr.mxu0 %v1716
    %v1718 = vand.u32 %v472, 4294901760
    %1719 = vmatpush2.msra.mxu0 %v1718
    %v1720 = vand.u32 %v471, 4294901760
    %1721 = vmatprep.subr.mxu0 %v1720
    %v1722 = vand.u32 %v470, 4294901760
    %1723 = vmatpush2.msra.mxu0 %v1722
    %v1724 = vand.u32 %v469, 4294901760
    %1725 = vmatprep.subr.mxu0 %v1724
    %v1726 = vand.u32 %v468, 4294901760
    %1727 = vmatpush2.msra.mxu0 %v1726
    %v1728 = vand.u32 %v467, 4294901760
    %1729 = vmatprep.subr.mxu0 %v1728
    %v1730 = vand.u32 %v466, 4294901760
    %1731 = vmatpush2.msra.mxu0 %v1730
    %v1732 = vand.u32 %v465, 4294901760
    %1733 = vmatprep.subr.mxu0 %v1732
    %v1734 = vand.u32 %v464, 4294901760
    %1735 = vmatpush2.msra.mxu0 %v1734
    %v1736 = vand.u32 %v463, 4294901760
    %1737 = vmatprep.subr.mxu0 %v1736
    %v1738 = vand.u32 %v462, 4294901760
    %1739 = vmatpush2.msra.mxu0 %v1738
    %v1740 = vand.u32 %v461, 4294901760
    %1741 = vmatprep.subr.mxu0 %v1740
    %v1742 = vand.u32 %v460, 4294901760
    %1743 = vmatpush2.msra.mxu0 %v1742
    %v1744 = vand.u32 %v459, 4294901760
    %1745 = vmatprep.subr.mxu0 %v1744
    %v1746 = vand.u32 %v458, 4294901760
    %1747 = vmatpush2.msra.mxu0 %v1746
    %v1748 = vand.u32 %v457, 4294901760
    %1749 = vmatprep.subr.mxu0 %v1748
    %v1750 = vand.u32 %v456, 4294901760
    %1751 = vmatpush2.msra.mxu0 %v1750
    %v1752 = vand.u32 %v455, 4294901760
    %1753 = vmatprep.subr.mxu0 %v1752
    %v1754 = vand.u32 %v454, 4294901760
    %1755 = vmatpush2.msra.mxu0 %v1754
    %v1756 = vand.u32 %v453, 4294901760
    %1757 = vmatprep.subr.mxu0 %v1756
    %v1758 = vand.u32 %v452, 4294901760
    %1759 = vmatpush2.msra.mxu0 %v1758
    %v1760 = vand.u32 %v451, 4294901760
    %1761 = vmatprep.subr.mxu0 %v1760
    %v1762 = vand.u32 %v450, 4294901760
    %1763 = vmatpush2.msra.mxu0 %v1762
    %v1764 = vand.u32 %v449, 4294901760
    %1765 = vmatprep.subr.mxu0 %v1764
    %v1766 = vand.u32 %v448, 4294901760
    %1767 = vmatpush2.msra.mxu0 %v1766
    %v1768 = vand.u32 %v490, 4294901760
    %1769 = vmatprep.mubr.f32.mxu0 %v1768
    %v1770 = vand.u32 %v489, 4294901760
    %1771 = vmatmul.mubr.f32.gmra.mxu0 %v1770
    %v1772 = vpop.f32.mrf.mxu0
    %v1773 = vadd.f32 %v1636, %v1772
    %v1774 = vpop.f32.mrf.mxu0
    %v1775 = vadd.f32 %v1638, %v1774
    %1776 = vdwg.mxu0
    %v1779 = vcombine.low %v1773, %v1775
    %v1781 = vunpack.c.l.s4 1983009808
    %v1782 = vunpack.c.0.s8 %v1781
    %v1783 = vlaneseq
    %v1784 = vshrl.u32 %v1783, 7
    %v1785 = vsub.s32 %v1782, %v1784
    %v1786 = vrot.slane %v1779, %v1785
    %v1788 = vadd.f32 %v480, %v1786
    %1789 = vst [vmem:[#allocation2] sm:$0xf] %v1788
    // Predicated region
    $region18: #{tpu_custom_call.1} parent=1 // pred_check
      %p1790 = pneg %p15
    $region19: #{tpu_custom_call.1} parent=1 // pred_check_branch
      %1792 = sbr.rel (%p1790) target = $region21
    $region20: #{tpu_custom_call.1} parent=1 // pred_region
      %v1793 = vld [vmem:[#allocation2] sm:$0xf]
      %v1794 = vld [vmem:[%s0] sm:$0x77]
      %v1796 = vrot.slane %v1793, 7
      %v1797 = vrot.slane %v1796, 2
      %v1799 = vrcp.pop %v1797
      %v1800 = vmul.f32 %v1793, %v1799
      %v1801 = vlog2.pop %v1800
      %v1802 = vmul.f32 %v1801, 0.6931472
      %v1805 = vunpack.c.l.s4 572653568
      %v1806 = vunpack.c.0.s8 %v1805
      %v1807 = vlaneseq
      %v1808 = vshrl.u32 %v1807, 7
      %v1809 = vsub.s32 %v1806, %v1808
      %v1810 = vrot.slane %v1802, %v1809
      %v1812 = vsub.f32 %v1794, %v1810
      %v1814 = vrot.slane %v1794, 5
      %v1815 = vrot.slane %v1814, 4
      %v1817 = vmul.f32 %v1812, %v1815
      %v1820 = vunpack.c.l.s4 1966171168
      %v1821 = vunpack.c.0.s8 %v1820
      %v1822 = vlaneseq
      %v1823 = vshrl.u32 %v1822, 7
      %v1824 = vsub.s32 %v1821, %v1823
      %v1825 = vrot.slane %v1817, %v1824
      %v1826 = vcombine.high %v1825, %v1825
      %v1828 = vunpack.c.l.s4 1966171168
      %v1829 = vunpack.c.0.s8 %v1828
      %v1830 = vlaneseq
      %v1831 = vshrl.u32 %v1830, 7
      %v1832 = vsub.s32 %v1829, %v1831
      %v1833 = vrot.slane %v1826, %v1832
      %v1835 = vlaneseq
      %vm1836 = vcmp.ge.s32.totalorder %v1835, 0
      %vm1837 = vcmp.lt.s32.totalorder %v1835, 256
      %vm1838 = vmand %vm1836, %vm1837
      %1839 = vst.msk [vmem:[#allocation3] sm:$0x3] %vm1838, %v1833
    $region21: #{tpu_custom_call.1} parent=1 // pred_fallthru
      _
    // Predicated region
    $region22: #{tpu_custom_call.1} parent=1 // pred_check
      _
    $region23: #{tpu_custom_call.1} parent=1 // pred_check_branch
      %1841 = sbr.rel (0) target = $region25
    $region24: #{tpu_custom_call.1} parent=1 // pred_region
      %s1843 = ssub.s32 32, 32
      %1844 = vsyncadd [#allocation4], %s1843
      %s1846 = sshll.u32 [#allocation3], 4
      %s1847 = int_to_ptr.vmem [resolvable:$true] %s1846
      %1849 = dma.vmem_to_hbm [thread:$0]  %s1847, 32, %s3, [#allocation4]
    $region25: #{tpu_custom_call.1} parent=1 // pred_fallthru
      _
    // Predicated region
    $region26: #{tpu_custom_call.1} parent=1 // pred_check
      _
    $region27: #{tpu_custom_call.1} parent=1 // pred_check_branch
      %1851 = sbr.rel (0) target = $region29
    $region28: #{tpu_custom_call.1} parent=1 // pred_region
      %1852 = dma.done [#allocation4], 32
    $region29: #{tpu_custom_call.1} parent=1 // pred_fallthru
      _
    %1853 = vsyncpa [#allocation4], 1

</llo_original>
